<compile_context>
chip_gen: v6e
topology: v6e:2x2x1
jax: 0.10.0
libtpu: 0.0.40
codegen_flags: <defaults>
</compile_context>

<pallas_src>
import functools
import math

import jax
import jax.numpy as jnp
from jax import lax
from jax.experimental import pallas as pl
from jax.experimental.pallas import tpu as pltpu


def _dsc_kernel(xs_ref, wdw_ref, b1_ref, wpw_ref, b2_ref, o_ref, *, stride, th, wo):
    """One (batch, row-tile) step of 3x3-conv + BN + ReLU + 1x1-conv + BN + ReLU.

    xs_ref : (s*s, Hs, Ws, Cin) bf16  padded, phase-split slab of ONE sample
                                      (block index constant along the row-tile
                                      axis -> DMA'd once per sample)
    wdw_ref: (9, Cin, Cin)      bf16  3x3 weights, BN1 scale folded into cols
    b1_ref : (1, Cin)           f32   folded BN1 bias (incl. conv bias)
    wpw_ref: (Cout, Cin)        bf16  1x1 weights^T, BN2 scale folded into rows
    b2_ref : (Cout, 1)          f32   folded BN2 bias (incl. conv bias)
    o_ref  : (1, Cout, th*wo)   bf16  NCHW-flat output rows of this tile
    """
    cin = b1_ref.shape[-1]
    rows = th * wo
    r0 = pl.multiple_of(pl.program_id(1) * th, th)      # first output row of tile

    acc = jnp.zeros((rows, cin), jnp.float32)
    for kh in range(3):                                  # statically unrolled: 9 taps
        for kw in range(3):
            ph = (kh % stride) * stride + (kw % stride)  # phase slab holding this tap
            tap = xs_ref[ph,
                         pl.ds(r0 + kh // stride, th),
                         pl.ds(kw // stride, wo), :]     # (th, wo, cin) bf16, contiguous
            acc += jnp.dot(tap.reshape(rows, cin), wdw_ref[kh * 3 + kw],
                           preferred_element_type=jnp.float32)

    h = jnp.maximum(acc + b1_ref[...], 0.0)              # BN1 bias + ReLU (f32)
    h_t = jnp.transpose(h).astype(jnp.bfloat16)          # (cin, rows): channels-major
    z = jnp.dot(wpw_ref[...], h_t,
                preferred_element_type=jnp.float32)      # pointwise conv -> (cout, rows)
    z = jnp.maximum(z + b2_ref[...], 0.0)                # BN2 bias + ReLU (f32)
    o_ref[0] = z.astype(o_ref.dtype)                     # lane-dense NCHW-flat store


def _pick_row_tile(ho, wo, target_rows=1024):
    """Pick TH (output rows per grid step) and Ho_pad (multiple of TH, >= ho).

    The flattened out-block last dim TH*wo must be a multiple of 128 (lane
    dense + satisfies the (8,128) block rule) unless one tile covers the whole
    map.  Prefer >=2 row tiles per sample (v7x megacore) and ~target_rows
    matmul rows per step to amortize the ~0.35us/step pipeline overhead.
    """
    th_unit = 128 // math.gcd(wo, 128)          # smallest TH with TH*wo % 128 == 0
    if th_unit >= ho:
        return ho, ho                           # one row-tile: block == full Q
    cap = max(th_unit, (target_rows // max(wo, 1)) // th_unit * th_unit)
    cap = min(cap, max(th_unit, (ho // 2) // th_unit * th_unit))  # keep >= 2 tiles
    if cap >= ho:
        return ho, ho
    for th in range(cap, 0, -th_unit):          # prefer exact divisors (no padding)
        if ho % th == 0:
            return th, ho
    th = cap
    ho_pad = -(-ho // th) * th
    if (ho_pad - ho) * 4 > ho:                  # too much padded work -> one full tile
        return ho, ho
    return th, ho_pad


def depthwise_separable_conv(x_nchw, params, *, stride, out_dtype=jnp.bfloat16):
    """x_nchw: (N, Cin, H, W) f32 -> (N, Cout, Ho, Wo) `out_dtype` (default bf16)."""
    eps = 1e-5
    (w_dw, b_dw, g1, be1, m1, v1, w_pw, b_pw, g2, be2, m2, v2) = params

    n, cin, h, w = x_nchw.shape
    cout = w_pw.shape[1]
    s = int(stride)
    ho = (h - 1) // s + 1                       # conv: kernel 3, pad 1
    wo = (w - 1) // s + 1
    th, ho_pad = _pick_row_tile(ho, wo)
    t_tiles = ho_pad // th
    hs = ho_pad + 2 // s                        # phase-slab rows (incl. halo)
    ws = wo + 2 // s

    # ---- glue (pure data movement, ~1x input bytes): NCHW->NHWC bf16, conv ---
    # ---- zero-pad, and (stride>1) a space-to-depth phase split so every    ---
    # ---- 3x3 tap is a contiguous window of one phase slab.                 ---
    x = jnp.transpose(x_nchw, (0, 2, 3, 1)).astype(jnp.bfloat16)
    xp = jnp.pad(x, ((0, 0), (1, s * hs - h - 1), (1, s * ws - w - 1), (0, 0)))
    xs = xp.reshape(n, hs, s, ws, s, cin).transpose(0, 2, 4, 1, 3, 5)
    xs = xs.reshape(n * s * s, hs, ws, cin)     # (N*phases, Hs, Ws, Cin)

    # ---- fold conv bias + inference-mode BN into weights / a single bias ----
    s1 = g1 / jnp.sqrt(v1 + eps)
    b1 = (be1 + (b_dw - m1) * s1).reshape(1, cin).astype(jnp.float32)
    wdw = (w_dw * s1).reshape(9, cin, cin).astype(jnp.bfloat16)     # (tap, ci, co)
    s2 = g2 / jnp.sqrt(v2 + eps)
    b2 = (be2 + (b_pw - m2) * s2).reshape(cout, 1).astype(jnp.float32)
    wpw_t = (w_pw * s2[None, :]).T.astype(jnp.bfloat16)             # (cout, cin)

    grid = (n, t_tiles)
    kernel = functools.partial(_dsc_kernel, stride=s, th=th, wo=wo)

    cost = pl.CostEstimate(
        flops=2 * n * ho_pad * wo * cin * (9 * cin + cout),
        transcendentals=0,
        bytes_accessed=(xs.size * 2 + wdw.size * 2 + wpw_t.size * 2
                        + 4 * (cin + cout) + n * cout * ho_pad * wo * 2))

    out_flat = pl.pallas_call(
        kernel,
        out_shape=jax.ShapeDtypeStruct((n, cout, ho_pad * wo), out_dtype),
        grid_spec=pltpu.PrefetchScalarGridSpec(
            num_scalar_prefetch=0,
            grid=grid,
            in_specs=[
                # Whole padded slab of sample b: block index constant along the
                # row-tile axis -> DMA'd once per sample and reused.
                pl.BlockSpec((s * s, hs, ws, cin), lambda b, t: (b, 0, 0, 0)),
                pl.BlockSpec((9, cin, cin), lambda b, t: (0, 0, 0)),
                pl.BlockSpec((1, cin), lambda b, t: (0, 0)),
                pl.BlockSpec((cout, cin), lambda b, t: (0, 0)),
                pl.BlockSpec((cout, 1), lambda b, t: (0, 0)),
            ],
            # NCHW-flat bf16 output: last block dim th*wo is a multiple of 128
            # (or the full Q) -> lane-dense stores, no XLA transpose afterwards.
            out_specs=pl.BlockSpec((1, cout, th * wo), lambda b, t: (b, 0, t)),
        ),
        compiler_params=pltpu.CompilerParams(
            dimension_semantics=("parallel", "parallel")),
        cost_estimate=cost,
    )(xs, wdw, b1, wpw_t, b2)

    out = out_flat.reshape(n, cout, ho_pad, wo)
    if ho_pad != ho:                            # crop padded rows (rare fallback)
        out = out[:, :, :ho, :]
    return out


def _reference(x_nchw, params, *, stride):
    """Pure-JAX reference at matching storage precision (bf16 operands/output)."""
    eps = 1e-5
    (w_dw, b_dw, g1, be1, m1, v1, w_pw, b_pw, g2, be2, m2, v2) = params
    f32 = jnp.float32
    s1 = g1 / jnp.sqrt(v1 + eps)
    s2 = g2 / jnp.sqrt(v2 + eps)
    x = jnp.transpose(x_nchw, (0, 2, 3, 1)).astype(jnp.bfloat16).astype(f32)
    wd = (w_dw * s1).astype(jnp.bfloat16).astype(f32)
    y = lax.conv_general_dilated(
        x, wd, window_strides=(stride, stride), padding=((1, 1), (1, 1)),
        dimension_numbers=("NHWC", "HWIO", "NHWC"))
    y = jnp.maximum(y + (be1 + (b_dw - m1) * s1), 0.0)
    y = y.astype(jnp.bfloat16).astype(f32)      # kernel keeps h in bf16 between matmuls
    wp = (w_pw * s2[None, :]).astype(jnp.bfloat16).astype(f32)
    z = jnp.einsum("nhwc,cd->nhwd", y, wp) + (be2 + (b_pw - m2) * s2)
    z = jnp.maximum(z, 0.0)
    return jnp.transpose(z, (0, 3, 1, 2)).astype(jnp.bfloat16)


if __name__ == "__main__":
    key = jax.random.PRNGKey(0)
    N, Cin, Cout, H, W = 2, 4, 8, 16, 16

    ks = jax.random.split(key, 13)
    # Conv3x3 weights in HWIO: (3, 3, Cin, Cin); conv bias (Cin,)
    w_dw = jax.random.normal(ks[0], (3, 3, Cin, Cin), jnp.float32) * 0.2
    b_dw = jax.random.normal(ks[1], (Cin,), jnp.float32) * 0.1
    # BN1 (inference-mode running stats, deterministic)
    g1 = 1.0 + 0.1 * jax.random.normal(ks[2], (Cin,), jnp.float32)
    be1 = 0.1 * jax.random.normal(ks[3], (Cin,), jnp.float32)
    m1 = 0.1 * jax.random.normal(ks[4], (Cin,), jnp.float32)
    v1 = 1.0 + 0.1 * jax.random.uniform(ks[5], (Cin,), jnp.float32)
    # Conv1x1 weights: (Cin, Cout); bias (Cout,)
    w_pw = jax.random.normal(ks[6], (Cin, Cout), jnp.float32) * 0.3
    b_pw = jax.random.normal(ks[7], (Cout,), jnp.float32) * 0.1
    # BN2
    g2 = 1.0 + 0.1 * jax.random.normal(ks[8], (Cout,), jnp.float32)
    be2 = 0.1 * jax.random.normal(ks[9], (Cout,), jnp.float32)
    m2 = 0.1 * jax.random.normal(ks[10], (Cout,), jnp.float32)
    v2 = 1.0 + 0.1 * jax.random.uniform(ks[11], (Cout,), jnp.float32)

    params = (w_dw, b_dw, g1, be1, m1, v1, w_pw, b_pw, g2, be2, m2, v2)
    x = jax.random.normal(ks[12], (N, Cin, H, W), jnp.float32)

    for stride in (1, 2):
        fn = jax.jit(functools.partial(depthwise_separable_conv, stride=stride))
        out = jax.block_until_ready(fn(x, params))
        ref = _reference(x, params, stride=stride)
        ho = (H - 1) // stride + 1
        wo = (W - 1) // stride + 1
        assert out.shape == ref.shape == (N, Cout, ho, wo), (out.shape, ref.shape)
        o32 = out.astype(jnp.float32)
        r32 = ref.astype(jnp.float32)
        assert jnp.allclose(o32, r32, rtol=2e-2, atol=2e-2), (
            stride, float(jnp.max(jnp.abs(o32 - r32))))

    print("KERNEL_OK")
</pallas_src>

<mosaic_0001>
module attributes {stable_mosaic.version = 11 : i64} {
  func.func @_dsc_kernel(%arg0: i32, %arg1: i32, %arg2: memref<1x18x18x4xbf16, #tpu.memory_space<vmem>>, %arg3: memref<9x4x4xbf16, #tpu.memory_space<vmem>>, %arg4: memref<1x4xf32, #tpu.memory_space<vmem>>, %arg5: memref<8x4xbf16, #tpu.memory_space<vmem>>, %arg6: memref<8x1xf32, #tpu.memory_space<vmem>>, %arg7: memref<1x8x128xbf16, #tpu.memory_space<vmem>>) attributes {dimension_semantics = [#tpu.dimension_semantics<parallel>, #tpu.dimension_semantics<parallel>], iteration_bounds = array<i64: 2, 2>, scalar_prefetch = 0 : i64, scratch_operands = 0 : i64, tpu.core_type = #tpu.core_type<tc>, window_params = [{transform_indices = @transform_0, window_bounds = array<i64: 1, 18, 18, 4>}, {pipeline_mode = #tpu.pipeline_mode<synchronous>, transform_indices = @transform_1, window_bounds = array<i64: 9, 4, 4>}, {pipeline_mode = #tpu.pipeline_mode<synchronous>, transform_indices = @transform_2, window_bounds = array<i64: 1, 4>}, {pipeline_mode = #tpu.pipeline_mode<synchronous>, transform_indices = @transform_3, window_bounds = array<i64: 8, 4>}, {pipeline_mode = #tpu.pipeline_mode<synchronous>, transform_indices = @transform_4, window_bounds = array<i64: 8, 1>}, {transform_indices = @transform_5, window_bounds = array<i64: 1, 8, 128>}]} {
    %c8_i32 = arith.constant 8 : i32
    %0 = arith.muli %arg1, %c8_i32 : i32
    %1 = tpu.assume_multiple %0, 8 : i32
    %cst = arith.constant 0.000000e+00 : f32
    %2 = vector.broadcast %cst : f32 to vector<128x4xf32>
    %c0_i32 = arith.constant 0 : i32
    %3 = arith.addi %1, %c0_i32 : i32
    %c0 = arith.constant 0 : index
    %4 = arith.index_cast %3 : i32 to index
    %c0_0 = arith.constant 0 : index
    %c0_1 = arith.constant 0 : index
    %5 = vector.load %arg2[%c0, %4, %c0_0, %c0_1] : memref<1x18x18x4xbf16, #tpu.memory_space<vmem>>, vector<1x8x16x4xbf16>
    %6 = vector.shape_cast %5 : vector<1x8x16x4xbf16> to vector<8x16x4xbf16>
    %7 = vector.shape_cast %6 : vector<8x16x4xbf16> to vector<128x4xbf16>
    %c0_2 = arith.constant 0 : index
    %c0_3 = arith.constant 0 : index
    %c0_4 = arith.constant 0 : index
    %8 = vector.load %arg3[%c0_2, %c0_3, %c0_4] : memref<9x4x4xbf16, #tpu.memory_space<vmem>>, vector<1x4x4xbf16>
    %9 = vector.shape_cast %8 : vector<1x4x4xbf16> to vector<4x4xbf16>
    %cst_5 = arith.constant dense<0.000000e+00> : vector<128x4xf32>
    %10 = tpu.matmul %7, %9, %cst_5 {dimension_numbers = #tpu.dot_dimension_numbers<[1], [0], [0], [1], [0, 0, 1, 1], [], []>} : vector<128x4xbf16>, vector<4x4xbf16>, vector<128x4xf32> -> vector<128x4xf32>
    %11 = arith.addf %2, %10 : vector<128x4xf32>
    %c0_i32_6 = arith.constant 0 : i32
    %12 = arith.addi %1, %c0_i32_6 : i32
    %c0_7 = arith.constant 0 : index
    %13 = arith.index_cast %12 : i32 to index
    %c1 = arith.constant 1 : index
    %c0_8 = arith.constant 0 : index
    %14 = vector.load %arg2[%c0_7, %13, %c1, %c0_8] : memref<1x18x18x4xbf16, #tpu.memory_space<vmem>>, vector<1x8x16x4xbf16>
    %15 = vector.shape_cast %14 : vector<1x8x16x4xbf16> to vector<8x16x4xbf16>
    %16 = vector.shape_cast %15 : vector<8x16x4xbf16> to vector<128x4xbf16>
    %c1_9 = arith.constant 1 : index
    %c0_10 = arith.constant 0 : index
    %c0_11 = arith.constant 0 : index
    %17 = vector.load %arg3[%c1_9, %c0_10, %c0_11] : memref<9x4x4xbf16, #tpu.memory_space<vmem>>, vector<1x4x4xbf16>
    %18 = vector.shape_cast %17 : vector<1x4x4xbf16> to vector<4x4xbf16>
    %cst_12 = arith.constant dense<0.000000e+00> : vector<128x4xf32>
    %19 = tpu.matmul %16, %18, %cst_12 {dimension_numbers = #tpu.dot_dimension_numbers<[1], [0], [0], [1], [0, 0, 1, 1], [], []>} : vector<128x4xbf16>, vector<4x4xbf16>, vector<128x4xf32> -> vector<128x4xf32>
    %20 = arith.addf %11, %19 : vector<128x4xf32>
    %c0_i32_13 = arith.constant 0 : i32
    %21 = arith.addi %1, %c0_i32_13 : i32
    %c0_14 = arith.constant 0 : index
    %22 = arith.index_cast %21 : i32 to index
    %c2 = arith.constant 2 : index
    %c0_15 = arith.constant 0 : index
    %23 = vector.load %arg2[%c0_14, %22, %c2, %c0_15] : memref<1x18x18x4xbf16, #tpu.memory_space<vmem>>, vector<1x8x16x4xbf16>
    %24 = vector.shape_cast %23 : vector<1x8x16x4xbf16> to vector<8x16x4xbf16>
    %25 = vector.shape_cast %24 : vector<8x16x4xbf16> to vector<128x4xbf16>
    %c2_16 = arith.constant 2 : index
    %c0_17 = arith.constant 0 : index
    %c0_18 = arith.constant 0 : index
    %26 = vector.load %arg3[%c2_16, %c0_17, %c0_18] : memref<9x4x4xbf16, #tpu.memory_space<vmem>>, vector<1x4x4xbf16>
    %27 = vector.shape_cast %26 : vector<1x4x4xbf16> to vector<4x4xbf16>
    %cst_19 = arith.constant dense<0.000000e+00> : vector<128x4xf32>
    %28 = tpu.matmul %25, %27, %cst_19 {dimension_numbers = #tpu.dot_dimension_numbers<[1], [0], [0], [1], [0, 0, 1, 1], [], []>} : vector<128x4xbf16>, vector<4x4xbf16>, vector<128x4xf32> -> vector<128x4xf32>
    %29 = arith.addf %20, %28 : vector<128x4xf32>
    %c1_i32 = arith.constant 1 : i32
    %30 = arith.addi %1, %c1_i32 : i32
    %c0_20 = arith.constant 0 : index
    %31 = arith.index_cast %30 : i32 to index
    %c0_21 = arith.constant 0 : index
    %c0_22 = arith.constant 0 : index
    %32 = vector.load %arg2[%c0_20, %31, %c0_21, %c0_22] : memref<1x18x18x4xbf16, #tpu.memory_space<vmem>>, vector<1x8x16x4xbf16>
    %33 = vector.shape_cast %32 : vector<1x8x16x4xbf16> to vector<8x16x4xbf16>
    %34 = vector.shape_cast %33 : vector<8x16x4xbf16> to vector<128x4xbf16>
    %c3 = arith.constant 3 : index
    %c0_23 = arith.constant 0 : index
    %c0_24 = arith.constant 0 : index
    %35 = vector.load %arg3[%c3, %c0_23, %c0_24] : memref<9x4x4xbf16, #tpu.memory_space<vmem>>, vector<1x4x4xbf16>
    %36 = vector.shape_cast %35 : vector<1x4x4xbf16> to vector<4x4xbf16>
    %cst_25 = arith.constant dense<0.000000e+00> : vector<128x4xf32>
    %37 = tpu.matmul %34, %36, %cst_25 {dimension_numbers = #tpu.dot_dimension_numbers<[1], [0], [0], [1], [0, 0, 1, 1], [], []>} : vector<128x4xbf16>, vector<4x4xbf16>, vector<128x4xf32> -> vector<128x4xf32>
    %38 = arith.addf %29, %37 : vector<128x4xf32>
    %c1_i32_26 = arith.constant 1 : i32
    %39 = arith.addi %1, %c1_i32_26 : i32
    %c0_27 = arith.constant 0 : index
    %40 = arith.index_cast %39 : i32 to index
    %c1_28 = arith.constant 1 : index
    %c0_29 = arith.constant 0 : index
    %41 = vector.load %arg2[%c0_27, %40, %c1_28, %c0_29] : memref<1x18x18x4xbf16, #tpu.memory_space<vmem>>, vector<1x8x16x4xbf16>
    %42 = vector.shape_cast %41 : vector<1x8x16x4xbf16> to vector<8x16x4xbf16>
    %43 = vector.shape_cast %42 : vector<8x16x4xbf16> to vector<128x4xbf16>
    %c4 = arith.constant 4 : index
    %c0_30 = arith.constant 0 : index
    %c0_31 = arith.constant 0 : index
    %44 = vector.load %arg3[%c4, %c0_30, %c0_31] : memref<9x4x4xbf16, #tpu.memory_space<vmem>>, vector<1x4x4xbf16>
    %45 = vector.shape_cast %44 : vector<1x4x4xbf16> to vector<4x4xbf16>
    %cst_32 = arith.constant dense<0.000000e+00> : vector<128x4xf32>
    %46 = tpu.matmul %43, %45, %cst_32 {dimension_numbers = #tpu.dot_dimension_numbers<[1], [0], [0], [1], [0, 0, 1, 1], [], []>} : vector<128x4xbf16>, vector<4x4xbf16>, vector<128x4xf32> -> vector<128x4xf32>
    %47 = arith.addf %38, %46 : vector<128x4xf32>
    %c1_i32_33 = arith.constant 1 : i32
    %48 = arith.addi %1, %c1_i32_33 : i32
    %c0_34 = arith.constant 0 : index
    %49 = arith.index_cast %48 : i32 to index
    %c2_35 = arith.constant 2 : index
    %c0_36 = arith.constant 0 : index
    %50 = vector.load %arg2[%c0_34, %49, %c2_35, %c0_36] : memref<1x18x18x4xbf16, #tpu.memory_space<vmem>>, vector<1x8x16x4xbf16>
    %51 = vector.shape_cast %50 : vector<1x8x16x4xbf16> to vector<8x16x4xbf16>
    %52 = vector.shape_cast %51 : vector<8x16x4xbf16> to vector<128x4xbf16>
    %c5 = arith.constant 5 : index
    %c0_37 = arith.constant 0 : index
    %c0_38 = arith.constant 0 : index
    %53 = vector.load %arg3[%c5, %c0_37, %c0_38] : memref<9x4x4xbf16, #tpu.memory_space<vmem>>, vector<1x4x4xbf16>
    %54 = vector.shape_cast %53 : vector<1x4x4xbf16> to vector<4x4xbf16>
    %cst_39 = arith.constant dense<0.000000e+00> : vector<128x4xf32>
    %55 = tpu.matmul %52, %54, %cst_39 {dimension_numbers = #tpu.dot_dimension_numbers<[1], [0], [0], [1], [0, 0, 1, 1], [], []>} : vector<128x4xbf16>, vector<4x4xbf16>, vector<128x4xf32> -> vector<128x4xf32>
    %56 = arith.addf %47, %55 : vector<128x4xf32>
    %c2_i32 = arith.constant 2 : i32
    %57 = arith.addi %1, %c2_i32 : i32
    %c0_40 = arith.constant 0 : index
    %58 = arith.index_cast %57 : i32 to index
    %c0_41 = arith.constant 0 : index
    %c0_42 = arith.constant 0 : index
    %59 = vector.load %arg2[%c0_40, %58, %c0_41, %c0_42] : memref<1x18x18x4xbf16, #tpu.memory_space<vmem>>, vector<1x8x16x4xbf16>
    %60 = vector.shape_cast %59 : vector<1x8x16x4xbf16> to vector<8x16x4xbf16>
    %61 = vector.shape_cast %60 : vector<8x16x4xbf16> to vector<128x4xbf16>
    %c6 = arith.constant 6 : index
    %c0_43 = arith.constant 0 : index
    %c0_44 = arith.constant 0 : index
    %62 = vector.load %arg3[%c6, %c0_43, %c0_44] : memref<9x4x4xbf16, #tpu.memory_space<vmem>>, vector<1x4x4xbf16>
    %63 = vector.shape_cast %62 : vector<1x4x4xbf16> to vector<4x4xbf16>
    %cst_45 = arith.constant dense<0.000000e+00> : vector<128x4xf32>
    %64 = tpu.matmul %61, %63, %cst_45 {dimension_numbers = #tpu.dot_dimension_numbers<[1], [0], [0], [1], [0, 0, 1, 1], [], []>} : vector<128x4xbf16>, vector<4x4xbf16>, vector<128x4xf32> -> vector<128x4xf32>
    %65 = arith.addf %56, %64 : vector<128x4xf32>
    %c2_i32_46 = arith.constant 2 : i32
    %66 = arith.addi %1, %c2_i32_46 : i32
    %c0_47 = arith.constant 0 : index
    %67 = arith.index_cast %66 : i32 to index
    %c1_48 = arith.constant 1 : index
    %c0_49 = arith.constant 0 : index
    %68 = vector.load %arg2[%c0_47, %67, %c1_48, %c0_49] : memref<1x18x18x4xbf16, #tpu.memory_space<vmem>>, vector<1x8x16x4xbf16>
    %69 = vector.shape_cast %68 : vector<1x8x16x4xbf16> to vector<8x16x4xbf16>
    %70 = vector.shape_cast %69 : vector<8x16x4xbf16> to vector<128x4xbf16>
    %c7 = arith.constant 7 : index
    %c0_50 = arith.constant 0 : index
    %c0_51 = arith.constant 0 : index
    %71 = vector.load %arg3[%c7, %c0_50, %c0_51] : memref<9x4x4xbf16, #tpu.memory_space<vmem>>, vector<1x4x4xbf16>
    %72 = vector.shape_cast %71 : vector<1x4x4xbf16> to vector<4x4xbf16>
    %cst_52 = arith.constant dense<0.000000e+00> : vector<128x4xf32>
    %73 = tpu.matmul %70, %72, %cst_52 {dimension_numbers = #tpu.dot_dimension_numbers<[1], [0], [0], [1], [0, 0, 1, 1], [], []>} : vector<128x4xbf16>, vector<4x4xbf16>, vector<128x4xf32> -> vector<128x4xf32>
    %74 = arith.addf %65, %73 : vector<128x4xf32>
    %c2_i32_53 = arith.constant 2 : i32
    %75 = arith.addi %1, %c2_i32_53 : i32
    %c0_54 = arith.constant 0 : index
    %76 = arith.index_cast %75 : i32 to index
    %c2_55 = arith.constant 2 : index
    %c0_56 = arith.constant 0 : index
    %77 = vector.load %arg2[%c0_54, %76, %c2_55, %c0_56] : memref<1x18x18x4xbf16, #tpu.memory_space<vmem>>, vector<1x8x16x4xbf16>
    %78 = vector.shape_cast %77 : vector<1x8x16x4xbf16> to vector<8x16x4xbf16>
    %79 = vector.shape_cast %78 : vector<8x16x4xbf16> to vector<128x4xbf16>
    %c8 = arith.constant 8 : index
    %c0_57 = arith.constant 0 : index
    %c0_58 = arith.constant 0 : index
    %80 = vector.load %arg3[%c8, %c0_57, %c0_58] : memref<9x4x4xbf16, #tpu.memory_space<vmem>>, vector<1x4x4xbf16>
    %81 = vector.shape_cast %80 : vector<1x4x4xbf16> to vector<4x4xbf16>
    %cst_59 = arith.constant dense<0.000000e+00> : vector<128x4xf32>
    %82 = tpu.matmul %79, %81, %cst_59 {dimension_numbers = #tpu.dot_dimension_numbers<[1], [0], [0], [1], [0, 0, 1, 1], [], []>} : vector<128x4xbf16>, vector<4x4xbf16>, vector<128x4xf32> -> vector<128x4xf32>
    %83 = arith.addf %74, %82 : vector<128x4xf32>
    %c0_60 = arith.constant 0 : index
    %c0_61 = arith.constant 0 : index
    %84 = vector.load %arg4[%c0_60, %c0_61] : memref<1x4xf32, #tpu.memory_space<vmem>>, vector<1x4xf32>
    %85 = vector.broadcast %84 : vector<1x4xf32> to vector<128x4xf32>
    %86 = arith.addf %83, %85 : vector<128x4xf32>
    %cst_62 = arith.constant 0.000000e+00 : f32
    %87 = vector.broadcast %cst_62 : f32 to vector<128x4xf32>
    %88 = arith.maximumf %86, %87 : vector<128x4xf32>
    %89 = tpu.transpose %88, [1, 0] : vector<128x4xf32> -> vector<4x128xf32>
    %90 = arith.truncf %89 : vector<4x128xf32> to vector<4x128xbf16>
    %c0_63 = arith.constant 0 : index
    %c0_64 = arith.constant 0 : index
    %91 = vector.load %arg5[%c0_63, %c0_64] : memref<8x4xbf16, #tpu.memory_space<vmem>>, vector<8x4xbf16>
    %cst_65 = arith.constant dense<0.000000e+00> : vector<8x128xf32>
    %92 = tpu.matmul %91, %90, %cst_65 {dimension_numbers = #tpu.dot_dimension_numbers<[1], [0], [0], [1], [0, 0, 1, 1], [], []>} : vector<8x4xbf16>, vector<4x128xbf16>, vector<8x128xf32> -> vector<8x128xf32>
    %c0_66 = arith.constant 0 : index
    %c0_67 = arith.constant 0 : index
    %93 = vector.load %arg6[%c0_66, %c0_67] : memref<8x1xf32, #tpu.memory_space<vmem>>, vector<8x1xf32>
    %94 = vector.broadcast %93 : vector<8x1xf32> to vector<8x128xf32>
    %95 = arith.addf %92, %94 : vector<8x128xf32>
    %cst_68 = arith.constant 0.000000e+00 : f32
    %96 = vector.broadcast %cst_68 : f32 to vector<8x128xf32>
    %97 = arith.maximumf %95, %96 : vector<8x128xf32>
    %98 = arith.truncf %97 : vector<8x128xf32> to vector<8x128xbf16>
    %c0_69 = arith.constant 0 : index
    %c0_70 = arith.constant 0 : index
    %c0_71 = arith.constant 0 : index
    %99 = vector.load %arg7[%c0_69, %c0_70, %c0_71] : memref<1x8x128xbf16, #tpu.memory_space<vmem>>, vector<1x8x128xbf16>
    %100 = vector.shape_cast %99 : vector<1x8x128xbf16> to vector<8x128xbf16>
    %101 = vector.shape_cast %98 : vector<8x128xbf16> to vector<1x8x128xbf16>
    tpu.vector_store %arg7[%c0_69, %c0_70, %c0_71], %101 {strides = array<i32>} : memref<1x8x128xbf16, #tpu.memory_space<vmem>>, vector<1x8x128xbf16>,
    return
  }
  func.func @transform_0(%arg0: i32, %arg1: i32) -> (i32, i32, i32, i32) {
    %c0_i32 = arith.constant 0 : i32
    %c0_i32_0 = arith.constant 0 : i32
    %c0_i32_1 = arith.constant 0 : i32
    %c0_i32_2 = arith.constant 0 : i32
    return %arg0, %c0_i32, %c0_i32_0, %c0_i32_1 : i32, i32, i32, i32
  }
  func.func @transform_1(%arg0: i32, %arg1: i32) -> (i32, i32, i32) {
    %c0_i32 = arith.constant 0 : i32
    %c0_i32_0 = arith.constant 0 : i32
    %c0_i32_1 = arith.constant 0 : i32
    %c0_i32_2 = arith.constant 0 : i32
    return %c0_i32, %c0_i32_0, %c0_i32_1 : i32, i32, i32
  }
  func.func @transform_2(%arg0: i32, %arg1: i32) -> (i32, i32) {
    %c0_i32 = arith.constant 0 : i32
    %c0_i32_0 = arith.constant 0 : i32
    %c0_i32_1 = arith.constant 0 : i32
    return %c0_i32, %c0_i32_0 : i32, i32
  }
  func.func @transform_3(%arg0: i32, %arg1: i32) -> (i32, i32) {
    %c0_i32 = arith.constant 0 : i32
    %c0_i32_0 = arith.constant 0 : i32
    %c0_i32_1 = arith.constant 0 : i32
    return %c0_i32, %c0_i32_0 : i32, i32
  }
  func.func @transform_4(%arg0: i32, %arg1: i32) -> (i32, i32) {
    %c0_i32 = arith.constant 0 : i32
    %c0_i32_0 = arith.constant 0 : i32
    %c0_i32_1 = arith.constant 0 : i32
    return %c0_i32, %c0_i32_0 : i32, i32
  }
  func.func @transform_5(%arg0: i32, %arg1: i32) -> (i32, i32, i32) {
    %c0_i32 = arith.constant 0 : i32
    %c0_i32_0 = arith.constant 0 : i32
    return %arg0, %c0_i32, %arg1 : i32, i32, i32
  }
}

</mosaic_0001>

<llo_original>
// kernel: depthwise_separable_conv.1
$region0: #{depthwise_separable_conv.1}
  #allocation0 [shape = 'u32[]', space=smem, size = 0x4, offset = 0x4, fixed_abs, tag = 'smem constant byte address 0x4 - core index']
  #allocation1 [shape = 'u32[144,128]{1,0:T(1,128)}', space=vmem, size = 0x12000, scoped, tag = 'internal scratch']
  %s0 = inlined_call_operand.vmem [shape: bf16[2,18,18,4], index: 0, kind: input, shape index: {}]
  %s1 = inlined_call_operand.vmem [shape: bf16[9,4,4], index: 1, kind: input, shape index: {}]
  %s2 = inlined_call_operand.vmem [shape: f32[1,4], index: 2, kind: input, shape index: {}]
  %s3 = inlined_call_operand.vmem [shape: bf16[8,4], index: 3, kind: input, shape index: {}]
  %s4 = inlined_call_operand.vmem [shape: f32[8,1], index: 4, kind: input, shape index: {}]
  %s5 = inlined_call_operand.vmem [shape: bf16[2,8,256], index: 5, kind: output, shape index: {}]
  %s6 = sld [smem:[#allocation0]]
  $region53: #{depthwise_separable_conv.1} parent=0
    _
  %s8 = ssub.s32 1, %s6
  %s9 = scalar_select 0, %s8, %s6
  loop: start=0, step=1, limit=6
  $region2: #{depthwise_separable_conv.1} parent=0 // loop_pre_header
    _
  $region3: #{depthwise_separable_conv.1} parent=0 // loop_header
    %s11 = sphi 0, %s15
    %p12 = scmp.ge.s32.totalorder %s11, 6
    %s18 = sphi 0, %s30
    %s19 = sphi 0, %s26
    %s20 = sphi 0, %s18
    %s21 = sphi 0, %s19
    %s22 = sphi 0, %s20
    %s23 = sphi 0, %s21
    %s33 = sphi 0, %s35
    %s36 = sphi 0, %s33
    %s37 = sphi 0, %s36
    %s53 = sphi 0, %s37
    %s57 = sphi 0, %s57
    %s59 = sphi 0, %s57
    %s60 = sphi 0, %s59
    %s74 = sphi 0, %s60
    %s78 = sphi 0, %s78
    %s80 = sphi 0, %s78
    %s81 = sphi 0, %s80
    %s95 = sphi 0, %s81
    %s99 = sphi 0, %s99
    %s101 = sphi 0, %s99
    %s102 = sphi 0, %s101
    %s116 = sphi 0, %s102
    %s120 = sphi 0, %s120
    %s122 = sphi 0, %s120
    %s123 = sphi 0, %s122
    %s137 = sphi 0, %s123
    %s145 = sphi 0, %s147
    %s148 = sphi 0, %s145
    %s149 = sphi 0, %s148
    %s165 = sphi 0, %s149
  $region4: #{depthwise_separable_conv.1} parent=0 // loop_header_branch
    %14 = sbr.rel (%p12) target = $region8
  $region5: #{depthwise_separable_conv.1} parent=0 // loop_body
    %s16 = ssub.s32 %s11, 1
    %s17 = ssub.s32 %s11, 2
    %s24 = sadd.s32 1, %s19
    %p25 = scmp.ge.s32.totalorder %s24, 2
    %s26 = scalar_select %p25, 0, %s24
    %s27 = sadd.s32 1, %s18
    %s28 = scalar_select %p25, %s27, %s18
    %p29 = scmp.ge.s32.totalorder %s28, 2
    %s30 = scalar_select %p29, 0, %s28
    %s31 = ssub.s32 %s18, %s30
    %p32 = scmp.eq.s32.totalorder %s31, 0
    %s34 = sadd.s32 %s33, 1
    %s35 = scalar_select %p32, %s33, %s34
    %p38 = pneg %p32
    %p39 = scmp.eq.s32.totalorder %s11, 3
    %p40 = por %p38, %p39
    %p41 = scmp.ne.s32.totalorder %s33, %s36
    %p42 = scmp.eq.s32.totalorder %s11, 0
    %p43 = por %p41, %p42
    %p44 = scmp.ne.s32.totalorder %s33, %s36
    %p45 = scmp.eq.s32.totalorder %s16, 3
    %p46 = por %p44, %p45
    %p47 = scmp.ne.s32.totalorder %s36, %s37
    %p48 = scmp.eq.s32.totalorder %s16, 0
    %p49 = por %p47, %p48
    %p50 = scmp.ne.s32.totalorder %s36, %s37
    %p51 = scmp.eq.s32.totalorder %s17, 3
    %p52 = por %p50, %p51
    %p54 = scmp.ne.s32.totalorder %s37, %s53
    %p55 = scmp.eq.s32.totalorder %s17, 0
    %p56 = por %p54, %p55
    %s58 = sadd.s32 %s57, 1
    %p61 = scmp.eq.s32.totalorder %s11, 3
    %p62 = scmp.ne.s32.totalorder %s57, %s59
    %p63 = scmp.eq.s32.totalorder %s11, 0
    %p64 = por %p62, %p63
    %p65 = scmp.ne.s32.totalorder %s57, %s59
    %p66 = scmp.eq.s32.totalorder %s16, 3
    %p67 = por %p65, %p66
    %p68 = scmp.ne.s32.totalorder %s59, %s60
    %p69 = scmp.eq.s32.totalorder %s16, 0
    %p70 = por %p68, %p69
    %p71 = scmp.ne.s32.totalorder %s59, %s60
    %p72 = scmp.eq.s32.totalorder %s17, 3
    %p73 = por %p71, %p72
    %p75 = scmp.ne.s32.totalorder %s60, %s74
    %p76 = scmp.eq.s32.totalorder %s17, 0
    %p77 = por %p75, %p76
    %s79 = sadd.s32 %s78, 1
    %p82 = scmp.eq.s32.totalorder %s11, 3
    %p83 = scmp.ne.s32.totalorder %s78, %s80
    %p84 = scmp.eq.s32.totalorder %s11, 0
    %p85 = por %p83, %p84
    %p86 = scmp.ne.s32.totalorder %s78, %s80
    %p87 = scmp.eq.s32.totalorder %s16, 3
    %p88 = por %p86, %p87
    %p89 = scmp.ne.s32.totalorder %s80, %s81
    %p90 = scmp.eq.s32.totalorder %s16, 0
    %p91 = por %p89, %p90
    %p92 = scmp.ne.s32.totalorder %s80, %s81
    %p93 = scmp.eq.s32.totalorder %s17, 3
    %p94 = por %p92, %p93
    %p96 = scmp.ne.s32.totalorder %s81, %s95
    %p97 = scmp.eq.s32.totalorder %s17, 0
    %p98 = por %p96, %p97
    %s100 = sadd.s32 %s99, 1
    %p103 = scmp.eq.s32.totalorder %s11, 3
    %p104 = scmp.ne.s32.totalorder %s99, %s101
    %p105 = scmp.eq.s32.totalorder %s11, 0
    %p106 = por %p104, %p105
    %p107 = scmp.ne.s32.totalorder %s99, %s101
    %p108 = scmp.eq.s32.totalorder %s16, 3
    %p109 = por %p107, %p108
    %p110 = scmp.ne.s32.totalorder %s101, %s102
    %p111 = scmp.eq.s32.totalorder %s16, 0
    %p112 = por %p110, %p111
    %p113 = scmp.ne.s32.totalorder %s101, %s102
    %p114 = scmp.eq.s32.totalorder %s17, 3
    %p115 = por %p113, %p114
    %p117 = scmp.ne.s32.totalorder %s102, %s116
    %p118 = scmp.eq.s32.totalorder %s17, 0
    %p119 = por %p117, %p118
    %s121 = sadd.s32 %s120, 1
    %p124 = scmp.eq.s32.totalorder %s11, 3
    %p125 = scmp.ne.s32.totalorder %s120, %s122
    %p126 = scmp.eq.s32.totalorder %s11, 0
    %p127 = por %p125, %p126
    %p128 = scmp.ne.s32.totalorder %s120, %s122
    %p129 = scmp.eq.s32.totalorder %s16, 3
    %p130 = por %p128, %p129
    %p131 = scmp.ne.s32.totalorder %s122, %s123
    %p132 = scmp.eq.s32.totalorder %s16, 0
    %p133 = por %p131, %p132
    %p134 = scmp.ne.s32.totalorder %s122, %s123
    %p135 = scmp.eq.s32.totalorder %s17, 3
    %p136 = por %p134, %p135
    %p138 = scmp.ne.s32.totalorder %s123, %s137
    %p139 = scmp.eq.s32.totalorder %s17, 0
    %p140 = por %p138, %p139
    %s141 = ssub.s32 %s18, %s30
    %s142 = ssub.s32 %s19, %s26
    %s143 = sor.u32 %s141, %s142
    %p144 = scmp.eq.s32.totalorder %s143, 0
    %s146 = sadd.s32 %s145, 1
    %s147 = scalar_select %p144, %s145, %s146
    %p150 = pneg %p144
    %p151 = scmp.eq.s32.totalorder %s11, 3
    %p152 = por %p150, %p151
    %p153 = scmp.ne.s32.totalorder %s145, %s148
    %p154 = scmp.eq.s32.totalorder %s11, 0
    %p155 = por %p153, %p154
    %p156 = scmp.ne.s32.totalorder %s145, %s148
    %p157 = scmp.eq.s32.totalorder %s16, 3
    %p158 = por %p156, %p157
    %p159 = scmp.ne.s32.totalorder %s148, %s149
    %p160 = scmp.eq.s32.totalorder %s16, 0
    %p161 = por %p159, %p160
    %p162 = scmp.ne.s32.totalorder %s148, %s149
    %p163 = scmp.eq.s32.totalorder %s17, 3
    %p164 = por %p162, %p163
    %p166 = scmp.ne.s32.totalorder %s149, %s165
    %p167 = scmp.eq.s32.totalorder %s17, 0
    %p168 = por %p166, %p167
    %p169 = scmp.le.s32.totalorder 1, %s11
    %p170 = scmp.lt.s32.totalorder %s11, 5
    %p171 = pnand %p169, %p170
    %p172 = pneg %p171
    // Predicated region
    $region9: #{depthwise_separable_conv.1} parent=5 // pred_check
      _
    $region10: #{depthwise_separable_conv.1} parent=5 // pred_check_branch
      %174 = sbr.rel (%p171) target = $region12
    $region11: #{depthwise_separable_conv.1} parent=5 // pred_region
      %s175 = ssub.s32 %s11, 1
      // Predicated region
      $region13: #{depthwise_separable_conv.1} parent=11 // pred_check
        %p176 = pneg %p70
      $region14: #{depthwise_separable_conv.1} parent=11 // pred_check_branch
        %178 = sbr.rel (%p176) target = $region16
      $region15: #{depthwise_separable_conv.1} parent=11 // pred_region
        _
      $region16: #{depthwise_separable_conv.1} parent=11 // pred_fallthru
        _
      // Predicated region
      $region17: #{depthwise_separable_conv.1} parent=11 // pred_check
        %p179 = pneg %p91
      $region18: #{depthwise_separable_conv.1} parent=11 // pred_check_branch
        %181 = sbr.rel (%p179) target = $region20
      $region19: #{depthwise_separable_conv.1} parent=11 // pred_region
        _
      $region20: #{depthwise_separable_conv.1} parent=11 // pred_fallthru
        _
      // Predicated region
      $region21: #{depthwise_separable_conv.1} parent=11 // pred_check
        %p182 = pneg %p112
      $region22: #{depthwise_separable_conv.1} parent=11 // pred_check_branch
        %184 = sbr.rel (%p182) target = $region24
      $region23: #{depthwise_separable_conv.1} parent=11 // pred_region
        _
      $region24: #{depthwise_separable_conv.1} parent=11 // pred_fallthru
        _
      // Predicated region
      $region25: #{depthwise_separable_conv.1} parent=11 // pred_check
        %p185 = pneg %p133
      $region26: #{depthwise_separable_conv.1} parent=11 // pred_check_branch
        %187 = sbr.rel (%p185) target = $region28
      $region27: #{depthwise_separable_conv.1} parent=11 // pred_region
        _
      $region28: #{depthwise_separable_conv.1} parent=11 // pred_fallthru
        _
    $region12: #{depthwise_separable_conv.1} parent=5 // pred_fallthru
      _
    %p188 = scmp.lt.s32.totalorder %s11, 4
    // Predicated region
    $region29: #{depthwise_separable_conv.1} parent=5 // pred_check
      %p189 = pneg %p188
    $region30: #{depthwise_separable_conv.1} parent=5 // pred_check_branch
      %191 = sbr.rel (%p189) target = $region32
    $region31: #{depthwise_separable_conv.1} parent=5 // pred_region
      // Predicated region
      $region33: #{depthwise_separable_conv.1} parent=31 // pred_check
        %p192 = pneg %p43
      $region34: #{depthwise_separable_conv.1} parent=31 // pred_check_branch
        %194 = sbr.rel (%p192) target = $region36
      $region35: #{depthwise_separable_conv.1} parent=31 // pred_region
        %p195 = scmp.lt.s32.totalorder %s18, 1
        %s196 = scalar_select %p195, %s18, 1
        %s197 = smul.addr %s196, 54
        %s198 = smul.addr %s197, 4
        %s199 = scalar_lea.vmem %s0, %s198
      $region36: #{depthwise_separable_conv.1} parent=31 // pred_fallthru
        _
    $region32: #{depthwise_separable_conv.1} parent=5 // pred_fallthru
      _
    %p200 = scmp.le.s32.totalorder 1, %s11
    %p201 = scmp.lt.s32.totalorder %s11, 5
    %p202 = pnand %p200, %p201
    %p203 = pneg %p202
    // Predicated region
    $region37: #{depthwise_separable_conv.1} parent=5 // pred_check
      _
    $region38: #{depthwise_separable_conv.1} parent=5 // pred_check_branch
      %205 = sbr.rel (%p202) target = $region40
    $region39: #{depthwise_separable_conv.1} parent=5 // pred_region
      %s206 = ssub.s32 %s11, 1
      %p207 = scmp.lt.s32.totalorder %s20, 1
      %s208 = scalar_select %p207, %s20, 1
      %s209 = smul.addr %s208, 54
      %s210 = smul.addr %s209, 4
      %s211 = scalar_lea.vmem %s0, %s210
      %p212 = pneg %p49
      %p213 = pneg %p46
      %p214 = pneg %p70
      %p215 = pneg %p67
      %p216 = pneg %p91
      %p217 = pneg %p88
      %p218 = pneg %p112
      %p219 = pneg %p109
      %p220 = pneg %p133
      %p221 = pneg %p130
      %p222 = pneg %p161
      %p223 = pneg %p158
      %p224 = scmp.lt.s32.totalorder %s20, 1
      %s225 = scalar_select %p224, %s20, 1
      %p226 = scmp.lt.s32.totalorder %s21, 1
      %s227 = scalar_select %p226, %s21, 1
      %s228 = smul.addr %s225, 2
      %s229 = sadd.s32 %s227, %s228
      %s230 = smul.addr %s229, 4
      %s231 = scalar_lea.vmem %s5, %s230
      %p232 = scmp.lt.s32.totalorder %s20, 1
      %s233 = scalar_select %p232, %s20, 1
      %s234 = smul.addr %s233, 54
      %s235 = smul.addr %s234, 4
      %s236 = scalar_lea.vmem %s0, %s235
      %p237 = scmp.lt.s32.totalorder %s20, 1
      %s238 = scalar_select %p237, %s20, 1
      %p239 = scmp.lt.s32.totalorder %s21, 1
      %s240 = scalar_select %p239, %s21, 1
      %s241 = smul.addr %s238, 2
      %s242 = sadd.s32 %s240, %s241
      %s243 = smul.addr %s242, 4
      %s244 = scalar_lea.vmem %s5, %s243
      %s246 = smul.u32 %s21, 8
      %s247 = smul.u32 %s246, 3
      %s248 = smul.addr %s247, 4
      %s249 = scalar_lea.vmem %s236, %s248
      %v250 = vld [vmem:[%s249] sm:$0xf]
      %v251 = vld [vmem:[%s249 + $0x4] sm:$0xf]
      %v252 = vld [vmem:[%s249 + $0xc] sm:$0xf]
      %v253 = vld [vmem:[%s249 + $0x10] sm:$0xf]
      %v254 = vld [vmem:[%s249 + $0x18] sm:$0xf]
      %v255 = vld [vmem:[%s249 + $0x1c] sm:$0xf]
      %v256 = vld [vmem:[%s249 + $0x24] sm:$0xf]
      %v257 = vld [vmem:[%s249 + $0x28] sm:$0xf]
      %v258 = vld [vmem:[%s249 + $0x30] sm:$0xf]
      %v259 = vld [vmem:[%s249 + $0x34] sm:$0xf]
      %v260 = vld [vmem:[%s249 + $0x3c] sm:$0xf]
      %v261 = vld [vmem:[%s249 + $0x40] sm:$0xf]
      %v262 = vld [vmem:[%s249 + $0x48] sm:$0xf]
      %v263 = vld [vmem:[%s249 + $0x4c] sm:$0xf]
      %v264 = vld [vmem:[%s249 + $0x54] sm:$0xf]
      %v265 = vld [vmem:[%s249 + $0x58] sm:$0xf]
      %v266 = vld [vmem:[%s1] sm:$0x3]
      %v267 = vld [vmem:[%s249 + $0x8] sm:$0x1]
      %v268 = vld [vmem:[%s249 + $0x14] sm:$0x1]
      %v269 = vld [vmem:[%s249 + $0x20] sm:$0x1]
      %v270 = vld [vmem:[%s249 + $0x2c] sm:$0x1]
      %v271 = vld [vmem:[%s249 + $0x38] sm:$0x1]
      %v272 = vld [vmem:[%s249 + $0x44] sm:$0x1]
      %v273 = vld [vmem:[%s249 + $0x50] sm:$0x1]
      %v274 = vld [vmem:[%s249 + $0x5c] sm:$0x1]
      %vm275 = vsmask.f32 3328
      %vm276 = vsmask.f32 7440
      %vm277 = vmor %vm275, %vm276
      %v279 = vshrl.u32 %v250, 16
      %v281 = vrot.slane %v279, 4
      %v282 = vshll.u32 %v250, 16
      %v284 = vrot.slane %v282, 5
      %v285 = vor.u32 %v281, %v284
      %v286 = vrot.slane %v285, 4
      %v288 = vshll.u32 %v251, 16
      %v290 = vrot.slane %v288, 5
      %v291 = vsel %vm277, %v286, %v290
      %v292 = vshrl.u32 %v251, 16
      %v294 = vrot.slane %v292, 4
      %v295 = vor.u32 %v294, %v290
      %v296 = vrot.slane %v295, 4
      %v298 = vshll.u32 %v267, 16
      %v300 = vrot.slane %v298, 5
      %v301 = vsel %vm277, %v296, %v300
      %v303 = vshrl.u32 %v252, 16
      %v305 = vrot.slane %v303, 4
      %v306 = vshll.u32 %v252, 16
      %v308 = vrot.slane %v306, 5
      %v309 = vor.u32 %v305, %v308
      %v310 = vrot.slane %v309, 4
      %v312 = vshll.u32 %v253, 16
      %v314 = vrot.slane %v312, 5
      %v315 = vsel %vm277, %v310, %v314
      %v316 = vshrl.u32 %v253, 16
      %v318 = vrot.slane %v316, 4
      %v319 = vor.u32 %v318, %v314
      %v320 = vrot.slane %v319, 4
      %v322 = vshll.u32 %v268, 16
      %v324 = vrot.slane %v322, 5
      %v325 = vsel %vm277, %v320, %v324
      %v327 = vshrl.u32 %v254, 16
      %v329 = vrot.slane %v327, 4
      %v330 = vshll.u32 %v254, 16
      %v332 = vrot.slane %v330, 5
      %v333 = vor.u32 %v329, %v332
      %v334 = vrot.slane %v333, 4
      %v336 = vshll.u32 %v255, 16
      %v338 = vrot.slane %v336, 5
      %v339 = vsel %vm277, %v334, %v338
      %v340 = vshrl.u32 %v255, 16
      %v342 = vrot.slane %v340, 4
      %v343 = vor.u32 %v342, %v338
      %v344 = vrot.slane %v343, 4
      %v346 = vshll.u32 %v269, 16
      %v348 = vrot.slane %v346, 5
      %v349 = vsel %vm277, %v344, %v348
      %v351 = vshrl.u32 %v256, 16
      %v353 = vrot.slane %v351, 4
      %v354 = vshll.u32 %v256, 16
      %v356 = vrot.slane %v354, 5
      %v357 = vor.u32 %v353, %v356
      %v358 = vrot.slane %v357, 4
      %v360 = vshll.u32 %v257, 16
      %v362 = vrot.slane %v360, 5
      %v363 = vsel %vm277, %v358, %v362
      %v364 = vshrl.u32 %v257, 16
      %v366 = vrot.slane %v364, 4
      %v367 = vor.u32 %v366, %v362
      %v368 = vrot.slane %v367, 4
      %v370 = vshll.u32 %v270, 16
      %v372 = vrot.slane %v370, 5
      %v373 = vsel %vm277, %v368, %v372
      %v375 = vshrl.u32 %v258, 16
      %v377 = vrot.slane %v375, 4
      %v378 = vshll.u32 %v258, 16
      %v380 = vrot.slane %v378, 5
      %v381 = vor.u32 %v377, %v380
      %v382 = vrot.slane %v381, 4
      %v384 = vshll.u32 %v259, 16
      %v386 = vrot.slane %v384, 5
      %v387 = vsel %vm277, %v382, %v386
      %v388 = vshrl.u32 %v259, 16
      %v390 = vrot.slane %v388, 4
      %v391 = vor.u32 %v390, %v386
      %v392 = vrot.slane %v391, 4
      %v394 = vshll.u32 %v271, 16
      %v396 = vrot.slane %v394, 5
      %v397 = vsel %vm277, %v392, %v396
      %v399 = vshrl.u32 %v260, 16
      %v401 = vrot.slane %v399, 4
      %v402 = vshll.u32 %v260, 16
      %v404 = vrot.slane %v402, 5
      %v405 = vor.u32 %v401, %v404
      %v406 = vrot.slane %v405, 4
      %v408 = vshll.u32 %v261, 16
      %v410 = vrot.slane %v408, 5
      %v411 = vsel %vm277, %v406, %v410
      %v412 = vshrl.u32 %v261, 16
      %v414 = vrot.slane %v412, 4
      %v415 = vor.u32 %v414, %v410
      %v416 = vrot.slane %v415, 4
      %v418 = vshll.u32 %v272, 16
      %v420 = vrot.slane %v418, 5
      %v421 = vsel %vm277, %v416, %v420
      %v423 = vshrl.u32 %v262, 16
      %v425 = vrot.slane %v423, 4
      %v426 = vshll.u32 %v262, 16
      %v428 = vrot.slane %v426, 5
      %v429 = vor.u32 %v425, %v428
      %v430 = vrot.slane %v429, 4
      %v432 = vshll.u32 %v263, 16
      %v434 = vrot.slane %v432, 5
      %v435 = vsel %vm277, %v430, %v434
      %v436 = vshrl.u32 %v263, 16
      %v438 = vrot.slane %v436, 4
      %v439 = vor.u32 %v438, %v434
      %v440 = vrot.slane %v439, 4
      %v442 = vshll.u32 %v273, 16
      %v444 = vrot.slane %v442, 5
      %v445 = vsel %vm277, %v440, %v444
      %v447 = vshrl.u32 %v264, 16
      %v449 = vrot.slane %v447, 4
      %v450 = vshll.u32 %v264, 16
      %v452 = vrot.slane %v450, 5
      %v453 = vor.u32 %v449, %v452
      %v454 = vrot.slane %v453, 4
      %v456 = vshll.u32 %v265, 16
      %v458 = vrot.slane %v456, 5
      %v459 = vsel %vm277, %v454, %v458
      %v460 = vshrl.u32 %v265, 16
      %v462 = vrot.slane %v460, 4
      %v463 = vor.u32 %v462, %v458
      %v464 = vrot.slane %v463, 4
      %v466 = vshll.u32 %v274, 16
      %v468 = vrot.slane %v466, 5
      %v469 = vsel %vm277, %v464, %v468
      %s470 = scalar_lea.vmem %s1, 2
      %v471 = vld [vmem:[%s470] sm:$0x3]
      %v472 = vunpack.c.l.b16 %v291
      %v473 = vunpack.c.l.b16 %v301
      %v474 = vunpack.c.l.b16 %v315
      %v475 = vunpack.c.l.b16 %v325
      %v476 = vunpack.c.l.b16 %v339
      %v477 = vunpack.c.l.b16 %v349
      %v478 = vunpack.c.l.b16 %v363
      %v479 = vunpack.c.l.b16 %v373
      %v480 = vunpack.c.l.b16 %v387
      %v481 = vunpack.c.l.b16 %v397
      %v482 = vunpack.c.l.b16 %v411
      %v483 = vunpack.c.l.b16 %v421
      %v484 = vunpack.c.l.b16 %v435
      %v485 = vunpack.c.l.b16 %v445
      %v486 = vunpack.c.l.b16 %v459
      %v487 = vunpack.c.l.b16 %v469
      %v488 = vpack.c.b16 %v473, %v472
      %v489 = vpack.c.b16 %v475, %v474
      %v490 = vpack.c.b16 %v477, %v476
      %v491 = vpack.c.b16 %v479, %v478
      %v492 = vpack.c.b16 %v481, %v480
      %v493 = vpack.c.b16 %v483, %v482
      %v494 = vpack.c.b16 %v485, %v484
      %v495 = vpack.c.b16 %v487, %v486
      %vm496 = vcmask 31744
      %v498 = vsel %vm496, %v488, 0
      %v501 = vsel %vm496, %v489, 0
      %v504 = vsel %vm496, %v490, 0
      %v507 = vsel %vm496, %v491, 0
      %v510 = vsel %vm496, %v492, 0
      %v513 = vsel %vm496, %v493, 0
      %v516 = vsel %vm496, %v494, 0
      %v519 = vsel %vm496, %v495, 0
      %vm521 = vcmask 1041408
      %v523 = vsel %vm521, %v471, 0
      %525 = vmatprep.subr.bf16.mxu0 0
      %526 = vmatpush1.bf16.msra.mxu0 0
      %527 = vmatprep.subr.bf16.mxu0 0
      %528 = vmatpush1.bf16.msra.mxu0 0
      %529 = vmatprep.subr.bf16.mxu0 0
      %530 = vmatpush1.bf16.msra.mxu0 0
      %531 = vmatprep.subr.bf16.mxu0 0
      %532 = vmatpush1.bf16.msra.mxu0 0
      %533 = vmatprep.subr.bf16.mxu0 0
      %534 = vmatpush1.bf16.msra.mxu0 0
      %535 = vmatprep.subr.bf16.mxu0 0
      %536 = vmatpush1.bf16.msra.mxu0 0
      %537 = vmatprep.subr.bf16.mxu0 0
      %538 = vmatpush1.bf16.msra.mxu0 0
      %539 = vmatprep.subr.bf16.mxu0 0
      %540 = vmatpush1.bf16.msra.mxu0 %v523
      %541 = vmatprep.subr.bf16.mxu0 0
      %542 = vmatpush2.bf16.msra.mxu0 0
      %543 = vmatprep.subr.bf16.mxu0 0
      %544 = vmatpush2.bf16.msra.mxu0 0
      %545 = vmatprep.subr.bf16.mxu0 0
      %546 = vmatpush2.bf16.msra.mxu0 0
      %547 = vmatprep.subr.bf16.mxu0 0
      %548 = vmatpush2.bf16.msra.mxu0 0
      %549 = vmatprep.subr.bf16.mxu0 0
      %550 = vmatpush2.bf16.msra.mxu0 0
      %551 = vmatprep.subr.bf16.mxu0 0
      %552 = vmatpush2.bf16.msra.mxu0 0
      %553 = vmatprep.subr.bf16.mxu0 0
      %554 = vmatpush2.bf16.msra.mxu0 0
      %555 = vmatprep.subr.bf16.mxu0 0
      %556 = vmatpush2.bf16.msra.mxu0 0
      %557 = vmatprep.mubr.bf16.mxu0 0
      %558 = vmatmul.mubr.bf16.gmra.mxu0 %v498
      %v559 = vpop.f32.mrf.mxu0
      %v560 = vadd.f32 0.0, %v559
      %v561 = vpop.f32.mrf.mxu0
      %v562 = vpop.f32.mrf.mxu0
      %v563 = vadd.f32 0.0, %v562
      %v564 = vpop.f32.mrf.mxu0
      %565 = vmatprep.mubr.bf16.mxu0 0
      %566 = vmatmul.mubr.bf16.gmra.mxu0 %v501
      %v567 = vpop.f32.mrf.mxu0
      %v568 = vadd.f32 0.0, %v567
      %v569 = vpop.f32.mrf.mxu0
      %v570 = vpop.f32.mrf.mxu0
      %v571 = vadd.f32 0.0, %v570
      %v572 = vpop.f32.mrf.mxu0
      %573 = vmatprep.mubr.bf16.mxu0 0
      %574 = vmatmul.mubr.bf16.gmra.mxu0 %v504
      %v575 = vpop.f32.mrf.mxu0
      %v576 = vadd.f32 0.0, %v575
      %v577 = vpop.f32.mrf.mxu0
      %v578 = vpop.f32.mrf.mxu0
      %v579 = vadd.f32 0.0, %v578
      %v580 = vpop.f32.mrf.mxu0
      %581 = vmatprep.mubr.bf16.mxu0 0
      %582 = vmatmul.mubr.bf16.gmra.mxu0 %v507
      %v583 = vpop.f32.mrf.mxu0
      %v584 = vadd.f32 0.0, %v583
      %v585 = vpop.f32.mrf.mxu0
      %v586 = vpop.f32.mrf.mxu0
      %v587 = vadd.f32 0.0, %v586
      %v588 = vpop.f32.mrf.mxu0
      %589 = vmatprep.mubr.bf16.mxu0 0
      %590 = vmatmul.mubr.bf16.gmra.mxu0 %v510
      %v591 = vpop.f32.mrf.mxu0
      %v592 = vadd.f32 0.0, %v591
      %v593 = vpop.f32.mrf.mxu0
      %v594 = vpop.f32.mrf.mxu0
      %v595 = vadd.f32 0.0, %v594
      %v596 = vpop.f32.mrf.mxu0
      %597 = vmatprep.mubr.bf16.mxu0 0
      %598 = vmatmul.mubr.bf16.gmra.mxu0 %v513
      %v599 = vpop.f32.mrf.mxu0
      %v600 = vadd.f32 0.0, %v599
      %v601 = vpop.f32.mrf.mxu0
      %v602 = vpop.f32.mrf.mxu0
      %v603 = vadd.f32 0.0, %v602
      %v604 = vpop.f32.mrf.mxu0
      %605 = vmatprep.mubr.bf16.mxu0 0
      %606 = vmatmul.mubr.bf16.gmra.mxu0 %v516
      %v607 = vpop.f32.mrf.mxu0
      %v608 = vadd.f32 0.0, %v607
      %v609 = vpop.f32.mrf.mxu0
      %v610 = vpop.f32.mrf.mxu0
      %v611 = vadd.f32 0.0, %v610
      %v612 = vpop.f32.mrf.mxu0
      %613 = vmatprep.mubr.bf16.mxu0 0
      %614 = vmatmul.mubr.bf16.gmra.mxu0 %v519
      %v615 = vpop.f32.mrf.mxu0
      %v616 = vadd.f32 0.0, %v615
      %v617 = vpop.f32.mrf.mxu0
      %v618 = vpop.f32.mrf.mxu0
      %v619 = vadd.f32 0.0, %v618
      %v620 = vpop.f32.mrf.mxu0
      %621 = vdwg.mxu0
      %v638 = vunpack.c.l.b16 %v250
      %v639 = vunpack.c.l.b16 %v251
      %v640 = vunpack.c.l.b16 %v252
      %v641 = vunpack.c.l.b16 %v253
      %v642 = vunpack.c.l.b16 %v254
      %v643 = vunpack.c.l.b16 %v255
      %v644 = vunpack.c.l.b16 %v256
      %v645 = vunpack.c.l.b16 %v257
      %v646 = vunpack.c.l.b16 %v258
      %v647 = vunpack.c.l.b16 %v259
      %v648 = vunpack.c.l.b16 %v260
      %v649 = vunpack.c.l.b16 %v261
      %v650 = vunpack.c.l.b16 %v262
      %v651 = vunpack.c.l.b16 %v263
      %v652 = vunpack.c.l.b16 %v264
      %v653 = vunpack.c.l.b16 %v265
      %v654 = vpack.c.b16 %v639, %v638
      %v655 = vpack.c.b16 %v641, %v640
      %v656 = vpack.c.b16 %v643, %v642
      %v657 = vpack.c.b16 %v645, %v644
      %v658 = vpack.c.b16 %v647, %v646
      %v659 = vpack.c.b16 %v649, %v648
      %v660 = vpack.c.b16 %v651, %v650
      %v661 = vpack.c.b16 %v653, %v652
      %v663 = vsel %vm496, %v654, 0
      %v666 = vsel %vm496, %v655, 0
      %v669 = vsel %vm496, %v656, 0
      %v672 = vsel %vm496, %v657, 0
      %v675 = vsel %vm496, %v658, 0
      %v678 = vsel %vm496, %v659, 0
      %v681 = vsel %vm496, %v660, 0
      %v684 = vsel %vm496, %v661, 0
      %v687 = vsel %vm521, %v266, 0
      %689 = vmatprep.subr.bf16.mxu0 0
      %690 = vmatpush1.bf16.msra.mxu0 0
      %691 = vmatprep.subr.bf16.mxu0 0
      %692 = vmatpush1.bf16.msra.mxu0 0
      %693 = vmatprep.subr.bf16.mxu0 0
      %694 = vmatpush1.bf16.msra.mxu0 0
      %695 = vmatprep.subr.bf16.mxu0 0
      %696 = vmatpush1.bf16.msra.mxu0 0
      %697 = vmatprep.subr.bf16.mxu0 0
      %698 = vmatpush1.bf16.msra.mxu0 0
      %699 = vmatprep.subr.bf16.mxu0 0
      %700 = vmatpush1.bf16.msra.mxu0 0
      %701 = vmatprep.subr.bf16.mxu0 0
      %702 = vmatpush1.bf16.msra.mxu0 0
      %703 = vmatprep.subr.bf16.mxu0 0
      %704 = vmatpush1.bf16.msra.mxu0 %v687
      %705 = vmatprep.subr.bf16.mxu0 0
      %706 = vmatpush2.bf16.msra.mxu0 0
      %707 = vmatprep.subr.bf16.mxu0 0
      %708 = vmatpush2.bf16.msra.mxu0 0
      %709 = vmatprep.subr.bf16.mxu0 0
      %710 = vmatpush2.bf16.msra.mxu0 0
      %711 = vmatprep.subr.bf16.mxu0 0
      %712 = vmatpush2.bf16.msra.mxu0 0
      %713 = vmatprep.subr.bf16.mxu0 0
      %714 = vmatpush2.bf16.msra.mxu0 0
      %715 = vmatprep.subr.bf16.mxu0 0
      %716 = vmatpush2.bf16.msra.mxu0 0
      %717 = vmatprep.subr.bf16.mxu0 0
      %718 = vmatpush2.bf16.msra.mxu0 0
      %719 = vmatprep.subr.bf16.mxu0 0
      %720 = vmatpush2.bf16.msra.mxu0 0
      %721 = vmatprep.mubr.bf16.mxu0 0
      %722 = vmatmul.mubr.bf16.gmra.mxu0 %v663
      %v723 = vpop.f32.mrf.mxu0
      %v724 = vadd.f32 %v560, %v723
      %v725 = vpop.f32.mrf.mxu0
      %v726 = vpop.f32.mrf.mxu0
      %v727 = vadd.f32 %v563, %v726
      %v728 = vpop.f32.mrf.mxu0
      %729 = vmatprep.mubr.bf16.mxu0 0
      %730 = vmatmul.mubr.bf16.gmra.mxu0 %v666
      %v731 = vpop.f32.mrf.mxu0
      %v732 = vadd.f32 %v568, %v731
      %v733 = vpop.f32.mrf.mxu0
      %v734 = vpop.f32.mrf.mxu0
      %v735 = vadd.f32 %v571, %v734
      %v736 = vpop.f32.mrf.mxu0
      %737 = vmatprep.mubr.bf16.mxu0 0
      %738 = vmatmul.mubr.bf16.gmra.mxu0 %v669
      %v739 = vpop.f32.mrf.mxu0
      %v740 = vadd.f32 %v576, %v739
      %v741 = vpop.f32.mrf.mxu0
      %v742 = vpop.f32.mrf.mxu0
      %v743 = vadd.f32 %v579, %v742
      %v744 = vpop.f32.mrf.mxu0
      %745 = vmatprep.mubr.bf16.mxu0 0
      %746 = vmatmul.mubr.bf16.gmra.mxu0 %v672
      %v747 = vpop.f32.mrf.mxu0
      %v748 = vadd.f32 %v584, %v747
      %v749 = vpop.f32.mrf.mxu0
      %v750 = vpop.f32.mrf.mxu0
      %v751 = vadd.f32 %v587, %v750
      %v752 = vpop.f32.mrf.mxu0
      %753 = vmatprep.mubr.bf16.mxu0 0
      %754 = vmatmul.mubr.bf16.gmra.mxu0 %v675
      %v755 = vpop.f32.mrf.mxu0
      %v756 = vadd.f32 %v592, %v755
      %v757 = vpop.f32.mrf.mxu0
      %v758 = vpop.f32.mrf.mxu0
      %v759 = vadd.f32 %v595, %v758
      %v760 = vpop.f32.mrf.mxu0
      %761 = vmatprep.mubr.bf16.mxu0 0
      %762 = vmatmul.mubr.bf16.gmra.mxu0 %v678
      %v763 = vpop.f32.mrf.mxu0
      %v764 = vadd.f32 %v600, %v763
      %v765 = vpop.f32.mrf.mxu0
      %v766 = vpop.f32.mrf.mxu0
      %v767 = vadd.f32 %v603, %v766
      %v768 = vpop.f32.mrf.mxu0
      %769 = vmatprep.mubr.bf16.mxu0 0
      %770 = vmatmul.mubr.bf16.gmra.mxu0 %v681
      %v771 = vpop.f32.mrf.mxu0
      %v772 = vadd.f32 %v608, %v771
      %v773 = vpop.f32.mrf.mxu0
      %v774 = vpop.f32.mrf.mxu0
      %v775 = vadd.f32 %v611, %v774
      %v776 = vpop.f32.mrf.mxu0
      %777 = vmatprep.mubr.bf16.mxu0 0
      %778 = vmatmul.mubr.bf16.gmra.mxu0 %v684
      %v779 = vpop.f32.mrf.mxu0
      %v780 = vadd.f32 %v616, %v779
      %v781 = vpop.f32.mrf.mxu0
      %v782 = vpop.f32.mrf.mxu0
      %v783 = vadd.f32 %v619, %v782
      %v784 = vpop.f32.mrf.mxu0
      %785 = vdwg.mxu0
      %v786 = vld [vmem:[%s249] sm:$0xe]
      %v787 = vld [vmem:[%s249 + $0xc] sm:$0xe]
      %v788 = vld [vmem:[%s249 + $0x18] sm:$0xe]
      %v789 = vld [vmem:[%s249 + $0x24] sm:$0xe]
      %v790 = vld [vmem:[%s249 + $0x30] sm:$0xe]
      %v791 = vld [vmem:[%s249 + $0x3c] sm:$0xe]
      %v792 = vld [vmem:[%s249 + $0x48] sm:$0xe]
      %v793 = vld [vmem:[%s249 + $0x54] sm:$0xe]
      %vm810 = vcmask 1042432
      %vm811 = vcmask 1046532
      %vm812 = vmor %vm810, %vm811
      %v813 = vrot.slane %v786, 5
      %v814 = vrot.slane %v813, 4
      %v815 = vrot.slane %v251, 5
      %v816 = vsel %vm812, %v814, %v815
      %v817 = vrot.slane %v815, 4
      %v818 = vrot.slane %v267, 5
      %v819 = vsel %vm812, %v817, %v818
      %v820 = vrot.slane %v787, 5
      %v821 = vrot.slane %v820, 4
      %v822 = vrot.slane %v253, 5
      %v823 = vsel %vm812, %v821, %v822
      %v824 = vrot.slane %v822, 4
      %v825 = vrot.slane %v268, 5
      %v826 = vsel %vm812, %v824, %v825
      %v827 = vrot.slane %v788, 5
      %v828 = vrot.slane %v827, 4
      %v829 = vrot.slane %v255, 5
      %v830 = vsel %vm812, %v828, %v829
      %v831 = vrot.slane %v829, 4
      %v832 = vrot.slane %v269, 5
      %v833 = vsel %vm812, %v831, %v832
      %v834 = vrot.slane %v789, 5
      %v835 = vrot.slane %v834, 4
      %v836 = vrot.slane %v257, 5
      %v837 = vsel %vm812, %v835, %v836
      %v838 = vrot.slane %v836, 4
      %v839 = vrot.slane %v270, 5
      %v840 = vsel %vm812, %v838, %v839
      %v841 = vrot.slane %v790, 5
      %v842 = vrot.slane %v841, 4
      %v843 = vrot.slane %v259, 5
      %v844 = vsel %vm812, %v842, %v843
      %v845 = vrot.slane %v843, 4
      %v846 = vrot.slane %v271, 5
      %v847 = vsel %vm812, %v845, %v846
      %v848 = vrot.slane %v791, 5
      %v849 = vrot.slane %v848, 4
      %v850 = vrot.slane %v261, 5
      %v851 = vsel %vm812, %v849, %v850
      %v852 = vrot.slane %v850, 4
      %v853 = vrot.slane %v272, 5
      %v854 = vsel %vm812, %v852, %v853
      %v855 = vrot.slane %v792, 5
      %v856 = vrot.slane %v855, 4
      %v857 = vrot.slane %v263, 5
      %v858 = vsel %vm812, %v856, %v857
      %v859 = vrot.slane %v857, 4
      %v860 = vrot.slane %v273, 5
      %v861 = vsel %vm812, %v859, %v860
      %v862 = vrot.slane %v793, 5
      %v863 = vrot.slane %v862, 4
      %v864 = vrot.slane %v265, 5
      %v865 = vsel %vm812, %v863, %v864
      %v866 = vrot.slane %v864, 4
      %v867 = vrot.slane %v274, 5
      %v868 = vsel %vm812, %v866, %v867
      %s869 = scalar_lea.vmem %s1, 4
      %v870 = vld [vmem:[%s869] sm:$0x3]
      %v871 = vunpack.c.l.b16 %v816
      %v872 = vunpack.c.l.b16 %v819
      %v873 = vunpack.c.l.b16 %v823
      %v874 = vunpack.c.l.b16 %v826
      %v875 = vunpack.c.l.b16 %v830
      %v876 = vunpack.c.l.b16 %v833
      %v877 = vunpack.c.l.b16 %v837
      %v878 = vunpack.c.l.b16 %v840
      %v879 = vunpack.c.l.b16 %v844
      %v880 = vunpack.c.l.b16 %v847
      %v881 = vunpack.c.l.b16 %v851
      %v882 = vunpack.c.l.b16 %v854
      %v883 = vunpack.c.l.b16 %v858
      %v884 = vunpack.c.l.b16 %v861
      %v885 = vunpack.c.l.b16 %v865
      %v886 = vunpack.c.l.b16 %v868
      %v887 = vpack.c.b16 %v872, %v871
      %v888 = vpack.c.b16 %v874, %v873
      %v889 = vpack.c.b16 %v876, %v875
      %v890 = vpack.c.b16 %v878, %v877
      %v891 = vpack.c.b16 %v880, %v879
      %v892 = vpack.c.b16 %v882, %v881
      %v893 = vpack.c.b16 %v884, %v883
      %v894 = vpack.c.b16 %v886, %v885
      %v896 = vsel %vm496, %v887, 0
      %v899 = vsel %vm496, %v888, 0
      %v902 = vsel %vm496, %v889, 0
      %v905 = vsel %vm496, %v890, 0
      %v908 = vsel %vm496, %v891, 0
      %v911 = vsel %vm496, %v892, 0
      %v914 = vsel %vm496, %v893, 0
      %v917 = vsel %vm496, %v894, 0
      %v920 = vsel %vm521, %v870, 0
      %922 = vmatprep.subr.bf16.mxu0 0
      %923 = vmatpush1.bf16.msra.mxu0 0
      %924 = vmatprep.subr.bf16.mxu0 0
      %925 = vmatpush1.bf16.msra.mxu0 0
      %926 = vmatprep.subr.bf16.mxu0 0
      %927 = vmatpush1.bf16.msra.mxu0 0
      %928 = vmatprep.subr.bf16.mxu0 0
      %929 = vmatpush1.bf16.msra.mxu0 0
      %930 = vmatprep.subr.bf16.mxu0 0
      %931 = vmatpush1.bf16.msra.mxu0 0
      %932 = vmatprep.subr.bf16.mxu0 0
      %933 = vmatpush1.bf16.msra.mxu0 0
      %934 = vmatprep.subr.bf16.mxu0 0
      %935 = vmatpush1.bf16.msra.mxu0 0
      %936 = vmatprep.subr.bf16.mxu0 0
      %937 = vmatpush1.bf16.msra.mxu0 %v920
      %938 = vmatprep.subr.bf16.mxu0 0
      %939 = vmatpush2.bf16.msra.mxu0 0
      %940 = vmatprep.subr.bf16.mxu0 0
      %941 = vmatpush2.bf16.msra.mxu0 0
      %942 = vmatprep.subr.bf16.mxu0 0
      %943 = vmatpush2.bf16.msra.mxu0 0
      %944 = vmatprep.subr.bf16.mxu0 0
      %945 = vmatpush2.bf16.msra.mxu0 0
      %946 = vmatprep.subr.bf16.mxu0 0
      %947 = vmatpush2.bf16.msra.mxu0 0
      %948 = vmatprep.subr.bf16.mxu0 0
      %949 = vmatpush2.bf16.msra.mxu0 0
      %950 = vmatprep.subr.bf16.mxu0 0
      %951 = vmatpush2.bf16.msra.mxu0 0
      %952 = vmatprep.subr.bf16.mxu0 0
      %953 = vmatpush2.bf16.msra.mxu0 0
      %954 = vmatprep.mubr.bf16.mxu0 0
      %955 = vmatmul.mubr.bf16.gmra.mxu0 %v896
      %v956 = vpop.f32.mrf.mxu0
      %v957 = vadd.f32 0.0, %v956
      %v958 = vpop.f32.mrf.mxu0
      %v959 = vpop.f32.mrf.mxu0
      %v960 = vadd.f32 0.0, %v959
      %v961 = vpop.f32.mrf.mxu0
      %962 = vmatprep.mubr.bf16.mxu0 0
      %963 = vmatmul.mubr.bf16.gmra.mxu0 %v899
      %v964 = vpop.f32.mrf.mxu0
      %v965 = vadd.f32 0.0, %v964
      %v966 = vpop.f32.mrf.mxu0
      %v967 = vpop.f32.mrf.mxu0
      %v968 = vadd.f32 0.0, %v967
      %v969 = vpop.f32.mrf.mxu0
      %970 = vmatprep.mubr.bf16.mxu0 0
      %971 = vmatmul.mubr.bf16.gmra.mxu0 %v902
      %v972 = vpop.f32.mrf.mxu0
      %v973 = vadd.f32 0.0, %v972
      %v974 = vpop.f32.mrf.mxu0
      %v975 = vpop.f32.mrf.mxu0
      %v976 = vadd.f32 0.0, %v975
      %v977 = vpop.f32.mrf.mxu0
      %978 = vmatprep.mubr.bf16.mxu0 0
      %979 = vmatmul.mubr.bf16.gmra.mxu0 %v905
      %v980 = vpop.f32.mrf.mxu0
      %v981 = vadd.f32 0.0, %v980
      %v982 = vpop.f32.mrf.mxu0
      %v983 = vpop.f32.mrf.mxu0
      %v984 = vadd.f32 0.0, %v983
      %v985 = vpop.f32.mrf.mxu0
      %986 = vmatprep.mubr.bf16.mxu0 0
      %987 = vmatmul.mubr.bf16.gmra.mxu0 %v908
      %v988 = vpop.f32.mrf.mxu0
      %v989 = vadd.f32 0.0, %v988
      %v990 = vpop.f32.mrf.mxu0
      %v991 = vpop.f32.mrf.mxu0
      %v992 = vadd.f32 0.0, %v991
      %v993 = vpop.f32.mrf.mxu0
      %994 = vmatprep.mubr.bf16.mxu0 0
      %995 = vmatmul.mubr.bf16.gmra.mxu0 %v911
      %v996 = vpop.f32.mrf.mxu0
      %v997 = vadd.f32 0.0, %v996
      %v998 = vpop.f32.mrf.mxu0
      %v999 = vpop.f32.mrf.mxu0
      %v1000 = vadd.f32 0.0, %v999
      %v1001 = vpop.f32.mrf.mxu0
      %1002 = vmatprep.mubr.bf16.mxu0 0
      %1003 = vmatmul.mubr.bf16.gmra.mxu0 %v914
      %v1004 = vpop.f32.mrf.mxu0
      %v1005 = vadd.f32 0.0, %v1004
      %v1006 = vpop.f32.mrf.mxu0
      %v1007 = vpop.f32.mrf.mxu0
      %v1008 = vadd.f32 0.0, %v1007
      %v1009 = vpop.f32.mrf.mxu0
      %1010 = vmatprep.mubr.bf16.mxu0 0
      %1011 = vmatmul.mubr.bf16.gmra.mxu0 %v917
      %v1012 = vpop.f32.mrf.mxu0
      %v1013 = vadd.f32 0.0, %v1012
      %v1014 = vpop.f32.mrf.mxu0
      %v1015 = vpop.f32.mrf.mxu0
      %v1016 = vadd.f32 0.0, %v1015
      %v1017 = vpop.f32.mrf.mxu0
      %1018 = vdwg.mxu0
      %v1019 = vadd.f32 %v724, %v957
      %v1020 = vadd.f32 %v727, %v960
      %v1021 = vadd.f32 %v732, %v965
      %v1022 = vadd.f32 %v735, %v968
      %v1023 = vadd.f32 %v740, %v973
      %v1024 = vadd.f32 %v743, %v976
      %v1025 = vadd.f32 %v748, %v981
      %v1026 = vadd.f32 %v751, %v984
      %v1027 = vadd.f32 %v756, %v989
      %v1028 = vadd.f32 %v759, %v992
      %v1029 = vadd.f32 %v764, %v997
      %v1030 = vadd.f32 %v767, %v1000
      %v1031 = vadd.f32 %v772, %v1005
      %v1032 = vadd.f32 %v775, %v1008
      %v1033 = vadd.f32 %v780, %v1013
      %v1034 = vadd.f32 %v783, %v1016
      %s1035 = sadd.s32 %s246, 1
      %s1036 = smul.u32 %s1035, 3
      %s1037 = smul.addr %s1036, 4
      %s1038 = scalar_lea.vmem %s236, %s1037
      %v1039 = vld [vmem:[%s1038] sm:$0xf]
      %v1040 = vld [vmem:[%s1038 + $0x4] sm:$0xf]
      %v1041 = vld [vmem:[%s1038 + $0xc] sm:$0xf]
      %v1042 = vld [vmem:[%s1038 + $0x10] sm:$0xf]
      %v1043 = vld [vmem:[%s1038 + $0x18] sm:$0xf]
      %v1044 = vld [vmem:[%s1038 + $0x1c] sm:$0xf]
      %v1045 = vld [vmem:[%s1038 + $0x24] sm:$0xf]
      %v1046 = vld [vmem:[%s1038 + $0x28] sm:$0xf]
      %v1047 = vld [vmem:[%s1038 + $0x30] sm:$0xf]
      %v1048 = vld [vmem:[%s1038 + $0x34] sm:$0xf]
      %v1049 = vld [vmem:[%s1038 + $0x3c] sm:$0xf]
      %v1050 = vld [vmem:[%s1038 + $0x40] sm:$0xf]
      %v1051 = vld [vmem:[%s1038 + $0x48] sm:$0xf]
      %v1052 = vld [vmem:[%s1038 + $0x4c] sm:$0xf]
      %v1053 = vld [vmem:[%s1038 + $0x54] sm:$0xf]
      %v1054 = vld [vmem:[%s1038 + $0x58] sm:$0xf]
      %s1055 = scalar_lea.vmem %s1, 6
      %v1056 = vld [vmem:[%s1055] sm:$0x3]
      %v1073 = vunpack.c.l.b16 %v1039
      %v1074 = vunpack.c.l.b16 %v1040
      %v1075 = vunpack.c.l.b16 %v1041
      %v1076 = vunpack.c.l.b16 %v1042
      %v1077 = vunpack.c.l.b16 %v1043
      %v1078 = vunpack.c.l.b16 %v1044
      %v1079 = vunpack.c.l.b16 %v1045
      %v1080 = vunpack.c.l.b16 %v1046
      %v1081 = vunpack.c.l.b16 %v1047
      %v1082 = vunpack.c.l.b16 %v1048
      %v1083 = vunpack.c.l.b16 %v1049
      %v1084 = vunpack.c.l.b16 %v1050
      %v1085 = vunpack.c.l.b16 %v1051
      %v1086 = vunpack.c.l.b16 %v1052
      %v1087 = vunpack.c.l.b16 %v1053
      %v1088 = vunpack.c.l.b16 %v1054
      %v1089 = vpack.c.b16 %v1074, %v1073
      %v1090 = vpack.c.b16 %v1076, %v1075
      %v1091 = vpack.c.b16 %v1078, %v1077
      %v1092 = vpack.c.b16 %v1080, %v1079
      %v1093 = vpack.c.b16 %v1082, %v1081
      %v1094 = vpack.c.b16 %v1084, %v1083
      %v1095 = vpack.c.b16 %v1086, %v1085
      %v1096 = vpack.c.b16 %v1088, %v1087
      %v1098 = vsel %vm496, %v1089, 0
      %v1101 = vsel %vm496, %v1090, 0
      %v1104 = vsel %vm496, %v1091, 0
      %v1107 = vsel %vm496, %v1092, 0
      %v1110 = vsel %vm496, %v1093, 0
      %v1113 = vsel %vm496, %v1094, 0
      %v1116 = vsel %vm496, %v1095, 0
      %v1119 = vsel %vm496, %v1096, 0
      %v1122 = vsel %vm521, %v1056, 0
      %1124 = vmatprep.subr.bf16.mxu0 0
      %1125 = vmatpush1.bf16.msra.mxu0 0
      %1126 = vmatprep.subr.bf16.mxu0 0
      %1127 = vmatpush1.bf16.msra.mxu0 0
      %1128 = vmatprep.subr.bf16.mxu0 0
      %1129 = vmatpush1.bf16.msra.mxu0 0
      %1130 = vmatprep.subr.bf16.mxu0 0
      %1131 = vmatpush1.bf16.msra.mxu0 0
      %1132 = vmatprep.subr.bf16.mxu0 0
      %1133 = vmatpush1.bf16.msra.mxu0 0
      %1134 = vmatprep.subr.bf16.mxu0 0
      %1135 = vmatpush1.bf16.msra.mxu0 0
      %1136 = vmatprep.subr.bf16.mxu0 0
      %1137 = vmatpush1.bf16.msra.mxu0 0
      %1138 = vmatprep.subr.bf16.mxu0 0
      %1139 = vmatpush1.bf16.msra.mxu0 %v1122
      %1140 = vmatprep.subr.bf16.mxu0 0
      %1141 = vmatpush2.bf16.msra.mxu0 0
      %1142 = vmatprep.subr.bf16.mxu0 0
      %1143 = vmatpush2.bf16.msra.mxu0 0
      %1144 = vmatprep.subr.bf16.mxu0 0
      %1145 = vmatpush2.bf16.msra.mxu0 0
      %1146 = vmatprep.subr.bf16.mxu0 0
      %1147 = vmatpush2.bf16.msra.mxu0 0
      %1148 = vmatprep.subr.bf16.mxu0 0
      %1149 = vmatpush2.bf16.msra.mxu0 0
      %1150 = vmatprep.subr.bf16.mxu0 0
      %1151 = vmatpush2.bf16.msra.mxu0 0
      %1152 = vmatprep.subr.bf16.mxu0 0
      %1153 = vmatpush2.bf16.msra.mxu0 0
      %1154 = vmatprep.subr.bf16.mxu0 0
      %1155 = vmatpush2.bf16.msra.mxu0 0
      %1156 = vmatprep.mubr.bf16.mxu0 0
      %1157 = vmatmul.mubr.bf16.gmra.mxu0 %v1098
      %v1158 = vpop.f32.mrf.mxu0
      %v1159 = vadd.f32 0.0, %v1158
      %v1160 = vpop.f32.mrf.mxu0
      %v1161 = vpop.f32.mrf.mxu0
      %v1162 = vadd.f32 0.0, %v1161
      %v1163 = vpop.f32.mrf.mxu0
      %1164 = vmatprep.mubr.bf16.mxu0 0
      %1165 = vmatmul.mubr.bf16.gmra.mxu0 %v1101
      %v1166 = vpop.f32.mrf.mxu0
      %v1167 = vadd.f32 0.0, %v1166
      %v1168 = vpop.f32.mrf.mxu0
      %v1169 = vpop.f32.mrf.mxu0
      %v1170 = vadd.f32 0.0, %v1169
      %v1171 = vpop.f32.mrf.mxu0
      %1172 = vmatprep.mubr.bf16.mxu0 0
      %1173 = vmatmul.mubr.bf16.gmra.mxu0 %v1104
      %v1174 = vpop.f32.mrf.mxu0
      %v1175 = vadd.f32 0.0, %v1174
      %v1176 = vpop.f32.mrf.mxu0
      %v1177 = vpop.f32.mrf.mxu0
      %v1178 = vadd.f32 0.0, %v1177
      %v1179 = vpop.f32.mrf.mxu0
      %1180 = vmatprep.mubr.bf16.mxu0 0
      %1181 = vmatmul.mubr.bf16.gmra.mxu0 %v1107
      %v1182 = vpop.f32.mrf.mxu0
      %v1183 = vadd.f32 0.0, %v1182
      %v1184 = vpop.f32.mrf.mxu0
      %v1185 = vpop.f32.mrf.mxu0
      %v1186 = vadd.f32 0.0, %v1185
      %v1187 = vpop.f32.mrf.mxu0
      %1188 = vmatprep.mubr.bf16.mxu0 0
      %1189 = vmatmul.mubr.bf16.gmra.mxu0 %v1110
      %v1190 = vpop.f32.mrf.mxu0
      %v1191 = vadd.f32 0.0, %v1190
      %v1192 = vpop.f32.mrf.mxu0
      %v1193 = vpop.f32.mrf.mxu0
      %v1194 = vadd.f32 0.0, %v1193
      %v1195 = vpop.f32.mrf.mxu0
      %1196 = vmatprep.mubr.bf16.mxu0 0
      %1197 = vmatmul.mubr.bf16.gmra.mxu0 %v1113
      %v1198 = vpop.f32.mrf.mxu0
      %v1199 = vadd.f32 0.0, %v1198
      %v1200 = vpop.f32.mrf.mxu0
      %v1201 = vpop.f32.mrf.mxu0
      %v1202 = vadd.f32 0.0, %v1201
      %v1203 = vpop.f32.mrf.mxu0
      %1204 = vmatprep.mubr.bf16.mxu0 0
      %1205 = vmatmul.mubr.bf16.gmra.mxu0 %v1116
      %v1206 = vpop.f32.mrf.mxu0
      %v1207 = vadd.f32 0.0, %v1206
      %v1208 = vpop.f32.mrf.mxu0
      %v1209 = vpop.f32.mrf.mxu0
      %v1210 = vadd.f32 0.0, %v1209
      %v1211 = vpop.f32.mrf.mxu0
      %1212 = vmatprep.mubr.bf16.mxu0 0
      %1213 = vmatmul.mubr.bf16.gmra.mxu0 %v1119
      %v1214 = vpop.f32.mrf.mxu0
      %v1215 = vadd.f32 0.0, %v1214
      %v1216 = vpop.f32.mrf.mxu0
      %v1217 = vpop.f32.mrf.mxu0
      %v1218 = vadd.f32 0.0, %v1217
      %v1219 = vpop.f32.mrf.mxu0
      %1220 = vdwg.mxu0
      %v1221 = vadd.f32 %v1019, %v1159
      %v1222 = vadd.f32 %v1020, %v1162
      %v1223 = vadd.f32 %v1021, %v1167
      %v1224 = vadd.f32 %v1022, %v1170
      %v1225 = vadd.f32 %v1023, %v1175
      %v1226 = vadd.f32 %v1024, %v1178
      %v1227 = vadd.f32 %v1025, %v1183
      %v1228 = vadd.f32 %v1026, %v1186
      %v1229 = vadd.f32 %v1027, %v1191
      %v1230 = vadd.f32 %v1028, %v1194
      %v1231 = vadd.f32 %v1029, %v1199
      %v1232 = vadd.f32 %v1030, %v1202
      %v1233 = vadd.f32 %v1031, %v1207
      %v1234 = vadd.f32 %v1032, %v1210
      %v1235 = vadd.f32 %v1033, %v1215
      %v1236 = vadd.f32 %v1034, %v1218
      %v1237 = vld [vmem:[%s1038] sm:$0xf]
      %v1238 = vld [vmem:[%s1038 + $0x4] sm:$0xf]
      %v1239 = vld [vmem:[%s1038 + $0x8] sm:$0x1]
      %v1240 = vld [vmem:[%s1038 + $0xc] sm:$0xf]
      %v1241 = vld [vmem:[%s1038 + $0x10] sm:$0xf]
      %v1242 = vld [vmem:[%s1038 + $0x14] sm:$0x1]
      %v1243 = vld [vmem:[%s1038 + $0x18] sm:$0xf]
      %v1244 = vld [vmem:[%s1038 + $0x1c] sm:$0xf]
      %v1245 = vld [vmem:[%s1038 + $0x20] sm:$0x1]
      %v1246 = vld [vmem:[%s1038 + $0x24] sm:$0xf]
      %v1247 = vld [vmem:[%s1038 + $0x28] sm:$0xf]
      %v1248 = vld [vmem:[%s1038 + $0x2c] sm:$0x1]
      %v1249 = vld [vmem:[%s1038 + $0x30] sm:$0xf]
      %v1250 = vld [vmem:[%s1038 + $0x34] sm:$0xf]
      %v1251 = vld [vmem:[%s1038 + $0x38] sm:$0x1]
      %v1252 = vld [vmem:[%s1038 + $0x3c] sm:$0xf]
      %v1253 = vld [vmem:[%s1038 + $0x40] sm:$0xf]
      %v1254 = vld [vmem:[%s1038 + $0x44] sm:$0x1]
      %v1255 = vld [vmem:[%s1038 + $0x48] sm:$0xf]
      %v1256 = vld [vmem:[%s1038 + $0x4c] sm:$0xf]
      %v1257 = vld [vmem:[%s1038 + $0x50] sm:$0x1]
      %v1258 = vld [vmem:[%s1038 + $0x54] sm:$0xf]
      %v1259 = vld [vmem:[%s1038 + $0x58] sm:$0xf]
      %v1260 = vld [vmem:[%s1038 + $0x5c] sm:$0x1]
      %v1262 = vshrl.u32 %v1237, 16
      %v1264 = vrot.slane %v1262, 4
      %v1265 = vshll.u32 %v1237, 16
      %v1267 = vrot.slane %v1265, 5
      %v1268 = vor.u32 %v1264, %v1267
      %v1269 = vrot.slane %v1268, 4
      %v1271 = vshll.u32 %v1238, 16
      %v1273 = vrot.slane %v1271, 5
      %v1274 = vsel %vm277, %v1269, %v1273
      %v1275 = vshrl.u32 %v1238, 16
      %v1277 = vrot.slane %v1275, 4
      %v1278 = vor.u32 %v1277, %v1273
      %v1279 = vrot.slane %v1278, 4
      %v1281 = vshll.u32 %v1239, 16
      %v1283 = vrot.slane %v1281, 5
      %v1284 = vsel %vm277, %v1279, %v1283
      %v1286 = vshrl.u32 %v1240, 16
      %v1288 = vrot.slane %v1286, 4
      %v1289 = vshll.u32 %v1240, 16
      %v1291 = vrot.slane %v1289, 5
      %v1292 = vor.u32 %v1288, %v1291
      %v1293 = vrot.slane %v1292, 4
      %v1295 = vshll.u32 %v1241, 16
      %v1297 = vrot.slane %v1295, 5
      %v1298 = vsel %vm277, %v1293, %v1297
      %v1299 = vshrl.u32 %v1241, 16
      %v1301 = vrot.slane %v1299, 4
      %v1302 = vor.u32 %v1301, %v1297
      %v1303 = vrot.slane %v1302, 4
      %v1305 = vshll.u32 %v1242, 16
      %v1307 = vrot.slane %v1305, 5
      %v1308 = vsel %vm277, %v1303, %v1307
      %v1310 = vshrl.u32 %v1243, 16
      %v1312 = vrot.slane %v1310, 4
      %v1313 = vshll.u32 %v1243, 16
      %v1315 = vrot.slane %v1313, 5
      %v1316 = vor.u32 %v1312, %v1315
      %v1317 = vrot.slane %v1316, 4
      %v1319 = vshll.u32 %v1244, 16
      %v1321 = vrot.slane %v1319, 5
      %v1322 = vsel %vm277, %v1317, %v1321
      %v1323 = vshrl.u32 %v1244, 16
      %v1325 = vrot.slane %v1323, 4
      %v1326 = vor.u32 %v1325, %v1321
      %v1327 = vrot.slane %v1326, 4
      %v1329 = vshll.u32 %v1245, 16
      %v1331 = vrot.slane %v1329, 5
      %v1332 = vsel %vm277, %v1327, %v1331
      %v1334 = vshrl.u32 %v1246, 16
      %v1336 = vrot.slane %v1334, 4
      %v1337 = vshll.u32 %v1246, 16
      %v1339 = vrot.slane %v1337, 5
      %v1340 = vor.u32 %v1336, %v1339
      %v1341 = vrot.slane %v1340, 4
      %v1343 = vshll.u32 %v1247, 16
      %v1345 = vrot.slane %v1343, 5
      %v1346 = vsel %vm277, %v1341, %v1345
      %v1347 = vshrl.u32 %v1247, 16
      %v1349 = vrot.slane %v1347, 4
      %v1350 = vor.u32 %v1349, %v1345
      %v1351 = vrot.slane %v1350, 4
      %v1353 = vshll.u32 %v1248, 16
      %v1355 = vrot.slane %v1353, 5
      %v1356 = vsel %vm277, %v1351, %v1355
      %v1358 = vshrl.u32 %v1249, 16
      %v1360 = vrot.slane %v1358, 4
      %v1361 = vshll.u32 %v1249, 16
      %v1363 = vrot.slane %v1361, 5
      %v1364 = vor.u32 %v1360, %v1363
      %v1365 = vrot.slane %v1364, 4
      %v1367 = vshll.u32 %v1250, 16
      %v1369 = vrot.slane %v1367, 5
      %v1370 = vsel %vm277, %v1365, %v1369
      %v1371 = vshrl.u32 %v1250, 16
      %v1373 = vrot.slane %v1371, 4
      %v1374 = vor.u32 %v1373, %v1369
      %v1375 = vrot.slane %v1374, 4
      %v1377 = vshll.u32 %v1251, 16
      %v1379 = vrot.slane %v1377, 5
      %v1380 = vsel %vm277, %v1375, %v1379
      %v1382 = vshrl.u32 %v1252, 16
      %v1384 = vrot.slane %v1382, 4
      %v1385 = vshll.u32 %v1252, 16
      %v1387 = vrot.slane %v1385, 5
      %v1388 = vor.u32 %v1384, %v1387
      %v1389 = vrot.slane %v1388, 4
      %v1391 = vshll.u32 %v1253, 16
      %v1393 = vrot.slane %v1391, 5
      %v1394 = vsel %vm277, %v1389, %v1393
      %v1395 = vshrl.u32 %v1253, 16
      %v1397 = vrot.slane %v1395, 4
      %v1398 = vor.u32 %v1397, %v1393
      %v1399 = vrot.slane %v1398, 4
      %v1401 = vshll.u32 %v1254, 16
      %v1403 = vrot.slane %v1401, 5
      %v1404 = vsel %vm277, %v1399, %v1403
      %v1406 = vshrl.u32 %v1255, 16
      %v1408 = vrot.slane %v1406, 4
      %v1409 = vshll.u32 %v1255, 16
      %v1411 = vrot.slane %v1409, 5
      %v1412 = vor.u32 %v1408, %v1411
      %v1413 = vrot.slane %v1412, 4
      %v1415 = vshll.u32 %v1256, 16
      %v1417 = vrot.slane %v1415, 5
      %v1418 = vsel %vm277, %v1413, %v1417
      %v1419 = vshrl.u32 %v1256, 16
      %v1421 = vrot.slane %v1419, 4
      %v1422 = vor.u32 %v1421, %v1417
      %v1423 = vrot.slane %v1422, 4
      %v1425 = vshll.u32 %v1257, 16
      %v1427 = vrot.slane %v1425, 5
      %v1428 = vsel %vm277, %v1423, %v1427
      %v1430 = vshrl.u32 %v1258, 16
      %v1432 = vrot.slane %v1430, 4
      %v1433 = vshll.u32 %v1258, 16
      %v1435 = vrot.slane %v1433, 5
      %v1436 = vor.u32 %v1432, %v1435
      %v1437 = vrot.slane %v1436, 4
      %v1439 = vshll.u32 %v1259, 16
      %v1441 = vrot.slane %v1439, 5
      %v1442 = vsel %vm277, %v1437, %v1441
      %v1443 = vshrl.u32 %v1259, 16
      %v1445 = vrot.slane %v1443, 4
      %v1446 = vor.u32 %v1445, %v1441
      %v1447 = vrot.slane %v1446, 4
      %v1449 = vshll.u32 %v1260, 16
      %v1451 = vrot.slane %v1449, 5
      %v1452 = vsel %vm277, %v1447, %v1451
      %s1453 = scalar_lea.vmem %s1, 8
      %v1454 = vld [vmem:[%s1453] sm:$0x3]
      %v1455 = vunpack.c.l.b16 %v1274
      %v1456 = vunpack.c.l.b16 %v1284
      %v1457 = vunpack.c.l.b16 %v1298
      %v1458 = vunpack.c.l.b16 %v1308
      %v1459 = vunpack.c.l.b16 %v1322
      %v1460 = vunpack.c.l.b16 %v1332
      %v1461 = vunpack.c.l.b16 %v1346
      %v1462 = vunpack.c.l.b16 %v1356
      %v1463 = vunpack.c.l.b16 %v1370
      %v1464 = vunpack.c.l.b16 %v1380
      %v1465 = vunpack.c.l.b16 %v1394
      %v1466 = vunpack.c.l.b16 %v1404
      %v1467 = vunpack.c.l.b16 %v1418
      %v1468 = vunpack.c.l.b16 %v1428
      %v1469 = vunpack.c.l.b16 %v1442
      %v1470 = vunpack.c.l.b16 %v1452
      %v1471 = vpack.c.b16 %v1456, %v1455
      %v1472 = vpack.c.b16 %v1458, %v1457
      %v1473 = vpack.c.b16 %v1460, %v1459
      %v1474 = vpack.c.b16 %v1462, %v1461
      %v1475 = vpack.c.b16 %v1464, %v1463
      %v1476 = vpack.c.b16 %v1466, %v1465
      %v1477 = vpack.c.b16 %v1468, %v1467
      %v1478 = vpack.c.b16 %v1470, %v1469
      %v1480 = vsel %vm496, %v1471, 0
      %v1483 = vsel %vm496, %v1472, 0
      %v1486 = vsel %vm496, %v1473, 0
      %v1489 = vsel %vm496, %v1474, 0
      %v1492 = vsel %vm496, %v1475, 0
      %v1495 = vsel %vm496, %v1476, 0
      %v1498 = vsel %vm496, %v1477, 0
      %v1501 = vsel %vm496, %v1478, 0
      %v1504 = vsel %vm521, %v1454, 0
      %1506 = vmatprep.subr.bf16.mxu0 0
      %1507 = vmatpush1.bf16.msra.mxu0 0
      %1508 = vmatprep.subr.bf16.mxu0 0
      %1509 = vmatpush1.bf16.msra.mxu0 0
      %1510 = vmatprep.subr.bf16.mxu0 0
      %1511 = vmatpush1.bf16.msra.mxu0 0
      %1512 = vmatprep.subr.bf16.mxu0 0
      %1513 = vmatpush1.bf16.msra.mxu0 0
      %1514 = vmatprep.subr.bf16.mxu0 0
      %1515 = vmatpush1.bf16.msra.mxu0 0
      %1516 = vmatprep.subr.bf16.mxu0 0
      %1517 = vmatpush1.bf16.msra.mxu0 0
      %1518 = vmatprep.subr.bf16.mxu0 0
      %1519 = vmatpush1.bf16.msra.mxu0 0
      %1520 = vmatprep.subr.bf16.mxu0 0
      %1521 = vmatpush1.bf16.msra.mxu0 %v1504
      %1522 = vmatprep.subr.bf16.mxu0 0
      %1523 = vmatpush2.bf16.msra.mxu0 0
      %1524 = vmatprep.subr.bf16.mxu0 0
      %1525 = vmatpush2.bf16.msra.mxu0 0
      %1526 = vmatprep.subr.bf16.mxu0 0
      %1527 = vmatpush2.bf16.msra.mxu0 0
      %1528 = vmatprep.subr.bf16.mxu0 0
      %1529 = vmatpush2.bf16.msra.mxu0 0
      %1530 = vmatprep.subr.bf16.mxu0 0
      %1531 = vmatpush2.bf16.msra.mxu0 0
      %1532 = vmatprep.subr.bf16.mxu0 0
      %1533 = vmatpush2.bf16.msra.mxu0 0
      %1534 = vmatprep.subr.bf16.mxu0 0
      %1535 = vmatpush2.bf16.msra.mxu0 0
      %1536 = vmatprep.subr.bf16.mxu0 0
      %1537 = vmatpush2.bf16.msra.mxu0 0
      %1538 = vmatprep.mubr.bf16.mxu0 0
      %1539 = vmatmul.mubr.bf16.gmra.mxu0 %v1480
      %v1540 = vpop.f32.mrf.mxu0
      %v1541 = vadd.f32 0.0, %v1540
      %v1542 = vpop.f32.mrf.mxu0
      %v1543 = vpop.f32.mrf.mxu0
      %v1544 = vadd.f32 0.0, %v1543
      %v1545 = vpop.f32.mrf.mxu0
      %1546 = vmatprep.mubr.bf16.mxu0 0
      %1547 = vmatmul.mubr.bf16.gmra.mxu0 %v1483
      %v1548 = vpop.f32.mrf.mxu0
      %v1549 = vadd.f32 0.0, %v1548
      %v1550 = vpop.f32.mrf.mxu0
      %v1551 = vpop.f32.mrf.mxu0
      %v1552 = vadd.f32 0.0, %v1551
      %v1553 = vpop.f32.mrf.mxu0
      %1554 = vmatprep.mubr.bf16.mxu0 0
      %1555 = vmatmul.mubr.bf16.gmra.mxu0 %v1486
      %v1556 = vpop.f32.mrf.mxu0
      %v1557 = vadd.f32 0.0, %v1556
      %v1558 = vpop.f32.mrf.mxu0
      %v1559 = vpop.f32.mrf.mxu0
      %v1560 = vadd.f32 0.0, %v1559
      %v1561 = vpop.f32.mrf.mxu0
      %1562 = vmatprep.mubr.bf16.mxu0 0
      %1563 = vmatmul.mubr.bf16.gmra.mxu0 %v1489
      %v1564 = vpop.f32.mrf.mxu0
      %v1565 = vadd.f32 0.0, %v1564
      %v1566 = vpop.f32.mrf.mxu0
      %v1567 = vpop.f32.mrf.mxu0
      %v1568 = vadd.f32 0.0, %v1567
      %v1569 = vpop.f32.mrf.mxu0
      %1570 = vmatprep.mubr.bf16.mxu0 0
      %1571 = vmatmul.mubr.bf16.gmra.mxu0 %v1492
      %v1572 = vpop.f32.mrf.mxu0
      %v1573 = vadd.f32 0.0, %v1572
      %v1574 = vpop.f32.mrf.mxu0
      %v1575 = vpop.f32.mrf.mxu0
      %v1576 = vadd.f32 0.0, %v1575
      %v1577 = vpop.f32.mrf.mxu0
      %1578 = vmatprep.mubr.bf16.mxu0 0
      %1579 = vmatmul.mubr.bf16.gmra.mxu0 %v1495
      %v1580 = vpop.f32.mrf.mxu0
      %v1581 = vadd.f32 0.0, %v1580
      %v1582 = vpop.f32.mrf.mxu0
      %v1583 = vpop.f32.mrf.mxu0
      %v1584 = vadd.f32 0.0, %v1583
      %v1585 = vpop.f32.mrf.mxu0
      %1586 = vmatprep.mubr.bf16.mxu0 0
      %1587 = vmatmul.mubr.bf16.gmra.mxu0 %v1498
      %v1588 = vpop.f32.mrf.mxu0
      %v1589 = vadd.f32 0.0, %v1588
      %v1590 = vpop.f32.mrf.mxu0
      %v1591 = vpop.f32.mrf.mxu0
      %v1592 = vadd.f32 0.0, %v1591
      %v1593 = vpop.f32.mrf.mxu0
      %1594 = vmatprep.mubr.bf16.mxu0 0
      %1595 = vmatmul.mubr.bf16.gmra.mxu0 %v1501
      %v1596 = vpop.f32.mrf.mxu0
      %v1597 = vadd.f32 0.0, %v1596
      %v1598 = vpop.f32.mrf.mxu0
      %v1599 = vpop.f32.mrf.mxu0
      %v1600 = vadd.f32 0.0, %v1599
      %v1601 = vpop.f32.mrf.mxu0
      %1602 = vdwg.mxu0
      %v1603 = vadd.f32 %v1221, %v1541
      %v1604 = vadd.f32 %v1222, %v1544
      %v1605 = vadd.f32 %v1223, %v1549
      %v1606 = vadd.f32 %v1224, %v1552
      %v1607 = vadd.f32 %v1225, %v1557
      %v1608 = vadd.f32 %v1226, %v1560
      %v1609 = vadd.f32 %v1227, %v1565
      %v1610 = vadd.f32 %v1228, %v1568
      %v1611 = vadd.f32 %v1229, %v1573
      %v1612 = vadd.f32 %v1230, %v1576
      %v1613 = vadd.f32 %v1231, %v1581
      %v1614 = vadd.f32 %v1232, %v1584
      %v1615 = vadd.f32 %v1233, %v1589
      %v1616 = vadd.f32 %v1234, %v1592
      %v1617 = vadd.f32 %v1235, %v1597
      %v1618 = vadd.f32 %v1236, %v1600
      %v1619 = vld [vmem:[%s1038] sm:$0xe]
      %v1620 = vld [vmem:[%s1038 + $0xc] sm:$0xe]
      %v1621 = vld [vmem:[%s1038 + $0x18] sm:$0xe]
      %v1622 = vld [vmem:[%s1038 + $0x24] sm:$0xe]
      %v1623 = vld [vmem:[%s1038 + $0x30] sm:$0xe]
      %v1624 = vld [vmem:[%s1038 + $0x3c] sm:$0xe]
      %v1625 = vld [vmem:[%s1038 + $0x48] sm:$0xe]
      %v1626 = vld [vmem:[%s1038 + $0x54] sm:$0xe]
      %v1651 = vrot.slane %v1619, 5
      %v1652 = vrot.slane %v1651, 4
      %v1653 = vrot.slane %v1238, 5
      %v1654 = vsel %vm812, %v1652, %v1653
      %v1655 = vrot.slane %v1653, 4
      %v1656 = vrot.slane %v1239, 5
      %v1657 = vsel %vm812, %v1655, %v1656
      %v1658 = vrot.slane %v1620, 5
      %v1659 = vrot.slane %v1658, 4
      %v1660 = vrot.slane %v1241, 5
      %v1661 = vsel %vm812, %v1659, %v1660
      %v1662 = vrot.slane %v1660, 4
      %v1663 = vrot.slane %v1242, 5
      %v1664 = vsel %vm812, %v1662, %v1663
      %v1665 = vrot.slane %v1621, 5
      %v1666 = vrot.slane %v1665, 4
      %v1667 = vrot.slane %v1244, 5
      %v1668 = vsel %vm812, %v1666, %v1667
      %v1669 = vrot.slane %v1667, 4
      %v1670 = vrot.slane %v1245, 5
      %v1671 = vsel %vm812, %v1669, %v1670
      %v1672 = vrot.slane %v1622, 5
      %v1673 = vrot.slane %v1672, 4
      %v1674 = vrot.slane %v1247, 5
      %v1675 = vsel %vm812, %v1673, %v1674
      %v1676 = vrot.slane %v1674, 4
      %v1677 = vrot.slane %v1248, 5
      %v1678 = vsel %vm812, %v1676, %v1677
      %v1679 = vrot.slane %v1623, 5
      %v1680 = vrot.slane %v1679, 4
      %v1681 = vrot.slane %v1250, 5
      %v1682 = vsel %vm812, %v1680, %v1681
      %v1683 = vrot.slane %v1681, 4
      %v1684 = vrot.slane %v1251, 5
      %v1685 = vsel %vm812, %v1683, %v1684
      %v1686 = vrot.slane %v1624, 5
      %v1687 = vrot.slane %v1686, 4
      %v1688 = vrot.slane %v1253, 5
      %v1689 = vsel %vm812, %v1687, %v1688
      %v1690 = vrot.slane %v1688, 4
      %v1691 = vrot.slane %v1254, 5
      %v1692 = vsel %vm812, %v1690, %v1691
      %v1693 = vrot.slane %v1625, 5
      %v1694 = vrot.slane %v1693, 4
      %v1695 = vrot.slane %v1256, 5
      %v1696 = vsel %vm812, %v1694, %v1695
      %v1697 = vrot.slane %v1695, 4
      %v1698 = vrot.slane %v1257, 5
      %v1699 = vsel %vm812, %v1697, %v1698
      %v1700 = vrot.slane %v1626, 5
      %v1701 = vrot.slane %v1700, 4
      %v1702 = vrot.slane %v1259, 5
      %v1703 = vsel %vm812, %v1701, %v1702
      %v1704 = vrot.slane %v1702, 4
      %v1705 = vrot.slane %v1260, 5
      %v1706 = vsel %vm812, %v1704, %v1705
      %s1707 = scalar_lea.vmem %s1, 10
      %v1708 = vld [vmem:[%s1707] sm:$0x3]
      %v1709 = vunpack.c.l.b16 %v1654
      %v1710 = vunpack.c.l.b16 %v1657
      %v1711 = vunpack.c.l.b16 %v1661
      %v1712 = vunpack.c.l.b16 %v1664
      %v1713 = vunpack.c.l.b16 %v1668
      %v1714 = vunpack.c.l.b16 %v1671
      %v1715 = vunpack.c.l.b16 %v1675
      %v1716 = vunpack.c.l.b16 %v1678
      %v1717 = vunpack.c.l.b16 %v1682
      %v1718 = vunpack.c.l.b16 %v1685
      %v1719 = vunpack.c.l.b16 %v1689
      %v1720 = vunpack.c.l.b16 %v1692
      %v1721 = vunpack.c.l.b16 %v1696
      %v1722 = vunpack.c.l.b16 %v1699
      %v1723 = vunpack.c.l.b16 %v1703
      %v1724 = vunpack.c.l.b16 %v1706
      %v1725 = vpack.c.b16 %v1710, %v1709
      %v1726 = vpack.c.b16 %v1712, %v1711
      %v1727 = vpack.c.b16 %v1714, %v1713
      %v1728 = vpack.c.b16 %v1716, %v1715
      %v1729 = vpack.c.b16 %v1718, %v1717
      %v1730 = vpack.c.b16 %v1720, %v1719
      %v1731 = vpack.c.b16 %v1722, %v1721
      %v1732 = vpack.c.b16 %v1724, %v1723
      %v1734 = vsel %vm496, %v1725, 0
      %v1737 = vsel %vm496, %v1726, 0
      %v1740 = vsel %vm496, %v1727, 0
      %v1743 = vsel %vm496, %v1728, 0
      %v1746 = vsel %vm496, %v1729, 0
      %v1749 = vsel %vm496, %v1730, 0
      %v1752 = vsel %vm496, %v1731, 0
      %v1755 = vsel %vm496, %v1732, 0
      %v1758 = vsel %vm521, %v1708, 0
      %1760 = vmatprep.subr.bf16.mxu0 0
      %1761 = vmatpush1.bf16.msra.mxu0 0
      %1762 = vmatprep.subr.bf16.mxu0 0
      %1763 = vmatpush1.bf16.msra.mxu0 0
      %1764 = vmatprep.subr.bf16.mxu0 0
      %1765 = vmatpush1.bf16.msra.mxu0 0
      %1766 = vmatprep.subr.bf16.mxu0 0
      %1767 = vmatpush1.bf16.msra.mxu0 0
      %1768 = vmatprep.subr.bf16.mxu0 0
      %1769 = vmatpush1.bf16.msra.mxu0 0
      %1770 = vmatprep.subr.bf16.mxu0 0
      %1771 = vmatpush1.bf16.msra.mxu0 0
      %1772 = vmatprep.subr.bf16.mxu0 0
      %1773 = vmatpush1.bf16.msra.mxu0 0
      %1774 = vmatprep.subr.bf16.mxu0 0
      %1775 = vmatpush1.bf16.msra.mxu0 %v1758
      %1776 = vmatprep.subr.bf16.mxu0 0
      %1777 = vmatpush2.bf16.msra.mxu0 0
      %1778 = vmatprep.subr.bf16.mxu0 0
      %1779 = vmatpush2.bf16.msra.mxu0 0
      %1780 = vmatprep.subr.bf16.mxu0 0
      %1781 = vmatpush2.bf16.msra.mxu0 0
      %1782 = vmatprep.subr.bf16.mxu0 0
      %1783 = vmatpush2.bf16.msra.mxu0 0
      %1784 = vmatprep.subr.bf16.mxu0 0
      %1785 = vmatpush2.bf16.msra.mxu0 0
      %1786 = vmatprep.subr.bf16.mxu0 0
      %1787 = vmatpush2.bf16.msra.mxu0 0
      %1788 = vmatprep.subr.bf16.mxu0 0
      %1789 = vmatpush2.bf16.msra.mxu0 0
      %1790 = vmatprep.subr.bf16.mxu0 0
      %1791 = vmatpush2.bf16.msra.mxu0 0
      %1792 = vmatprep.mubr.bf16.mxu0 0
      %1793 = vmatmul.mubr.bf16.gmra.mxu0 %v1734
      %v1794 = vpop.f32.mrf.mxu0
      %v1795 = vadd.f32 0.0, %v1794
      %v1796 = vpop.f32.mrf.mxu0
      %v1797 = vpop.f32.mrf.mxu0
      %v1798 = vadd.f32 0.0, %v1797
      %v1799 = vpop.f32.mrf.mxu0
      %1800 = vmatprep.mubr.bf16.mxu0 0
      %1801 = vmatmul.mubr.bf16.gmra.mxu0 %v1737
      %v1802 = vpop.f32.mrf.mxu0
      %v1803 = vadd.f32 0.0, %v1802
      %v1804 = vpop.f32.mrf.mxu0
      %v1805 = vpop.f32.mrf.mxu0
      %v1806 = vadd.f32 0.0, %v1805
      %v1807 = vpop.f32.mrf.mxu0
      %1808 = vmatprep.mubr.bf16.mxu0 0
      %1809 = vmatmul.mubr.bf16.gmra.mxu0 %v1740
      %v1810 = vpop.f32.mrf.mxu0
      %v1811 = vadd.f32 0.0, %v1810
      %v1812 = vpop.f32.mrf.mxu0
      %v1813 = vpop.f32.mrf.mxu0
      %v1814 = vadd.f32 0.0, %v1813
      %v1815 = vpop.f32.mrf.mxu0
      %1816 = vmatprep.mubr.bf16.mxu0 0
      %1817 = vmatmul.mubr.bf16.gmra.mxu0 %v1743
      %v1818 = vpop.f32.mrf.mxu0
      %v1819 = vadd.f32 0.0, %v1818
      %v1820 = vpop.f32.mrf.mxu0
      %v1821 = vpop.f32.mrf.mxu0
      %v1822 = vadd.f32 0.0, %v1821
      %v1823 = vpop.f32.mrf.mxu0
      %1824 = vmatprep.mubr.bf16.mxu0 0
      %1825 = vmatmul.mubr.bf16.gmra.mxu0 %v1746
      %v1826 = vpop.f32.mrf.mxu0
      %v1827 = vadd.f32 0.0, %v1826
      %v1828 = vpop.f32.mrf.mxu0
      %v1829 = vpop.f32.mrf.mxu0
      %v1830 = vadd.f32 0.0, %v1829
      %v1831 = vpop.f32.mrf.mxu0
      %1832 = vmatprep.mubr.bf16.mxu0 0
      %1833 = vmatmul.mubr.bf16.gmra.mxu0 %v1749
      %v1834 = vpop.f32.mrf.mxu0
      %v1835 = vadd.f32 0.0, %v1834
      %v1836 = vpop.f32.mrf.mxu0
      %v1837 = vpop.f32.mrf.mxu0
      %v1838 = vadd.f32 0.0, %v1837
      %v1839 = vpop.f32.mrf.mxu0
      %1840 = vmatprep.mubr.bf16.mxu0 0
      %1841 = vmatmul.mubr.bf16.gmra.mxu0 %v1752
      %v1842 = vpop.f32.mrf.mxu0
      %v1843 = vadd.f32 0.0, %v1842
      %v1844 = vpop.f32.mrf.mxu0
      %v1845 = vpop.f32.mrf.mxu0
      %v1846 = vadd.f32 0.0, %v1845
      %v1847 = vpop.f32.mrf.mxu0
      %1848 = vmatprep.mubr.bf16.mxu0 0
      %1849 = vmatmul.mubr.bf16.gmra.mxu0 %v1755
      %v1850 = vpop.f32.mrf.mxu0
      %v1851 = vadd.f32 0.0, %v1850
      %v1852 = vpop.f32.mrf.mxu0
      %v1853 = vpop.f32.mrf.mxu0
      %v1854 = vadd.f32 0.0, %v1853
      %v1855 = vpop.f32.mrf.mxu0
      %1856 = vdwg.mxu0
      %v1857 = vadd.f32 %v1603, %v1795
      %v1858 = vadd.f32 %v1604, %v1798
      %v1859 = vadd.f32 %v1605, %v1803
      %v1860 = vadd.f32 %v1606, %v1806
      %v1861 = vadd.f32 %v1607, %v1811
      %v1862 = vadd.f32 %v1608, %v1814
      %v1863 = vadd.f32 %v1609, %v1819
      %v1864 = vadd.f32 %v1610, %v1822
      %v1865 = vadd.f32 %v1611, %v1827
      %v1866 = vadd.f32 %v1612, %v1830
      %v1867 = vadd.f32 %v1613, %v1835
      %v1868 = vadd.f32 %v1614, %v1838
      %v1869 = vadd.f32 %v1615, %v1843
      %v1870 = vadd.f32 %v1616, %v1846
      %v1871 = vadd.f32 %v1617, %v1851
      %v1872 = vadd.f32 %v1618, %v1854
      %s1873 = sadd.s32 %s246, 2
      %s1874 = smul.u32 %s1873, 3
      %s1875 = smul.addr %s1874, 4
      %s1876 = scalar_lea.vmem %s236, %s1875
      %v1877 = vld [vmem:[%s1876] sm:$0xf]
      %v1878 = vld [vmem:[%s1876 + $0x4] sm:$0xf]
      %v1879 = vld [vmem:[%s1876 + $0xc] sm:$0xf]
      %v1880 = vld [vmem:[%s1876 + $0x10] sm:$0xf]
      %v1881 = vld [vmem:[%s1876 + $0x18] sm:$0xf]
      %v1882 = vld [vmem:[%s1876 + $0x1c] sm:$0xf]
      %v1883 = vld [vmem:[%s1876 + $0x24] sm:$0xf]
      %v1884 = vld [vmem:[%s1876 + $0x28] sm:$0xf]
      %v1885 = vld [vmem:[%s1876 + $0x30] sm:$0xf]
      %v1886 = vld [vmem:[%s1876 + $0x34] sm:$0xf]
      %v1887 = vld [vmem:[%s1876 + $0x3c] sm:$0xf]
      %v1888 = vld [vmem:[%s1876 + $0x40] sm:$0xf]
      %v1889 = vld [vmem:[%s1876 + $0x48] sm:$0xf]
      %v1890 = vld [vmem:[%s1876 + $0x4c] sm:$0xf]
      %v1891 = vld [vmem:[%s1876 + $0x54] sm:$0xf]
      %v1892 = vld [vmem:[%s1876 + $0x58] sm:$0xf]
      %s1893 = scalar_lea.vmem %s1, 12
      %v1894 = vld [vmem:[%s1893] sm:$0x3]
      %v1911 = vunpack.c.l.b16 %v1877
      %v1912 = vunpack.c.l.b16 %v1878
      %v1913 = vunpack.c.l.b16 %v1879
      %v1914 = vunpack.c.l.b16 %v1880
      %v1915 = vunpack.c.l.b16 %v1881
      %v1916 = vunpack.c.l.b16 %v1882
      %v1917 = vunpack.c.l.b16 %v1883
      %v1918 = vunpack.c.l.b16 %v1884
      %v1919 = vunpack.c.l.b16 %v1885
      %v1920 = vunpack.c.l.b16 %v1886
      %v1921 = vunpack.c.l.b16 %v1887
      %v1922 = vunpack.c.l.b16 %v1888
      %v1923 = vunpack.c.l.b16 %v1889
      %v1924 = vunpack.c.l.b16 %v1890
      %v1925 = vunpack.c.l.b16 %v1891
      %v1926 = vunpack.c.l.b16 %v1892
      %v1927 = vpack.c.b16 %v1912, %v1911
      %v1928 = vpack.c.b16 %v1914, %v1913
      %v1929 = vpack.c.b16 %v1916, %v1915
      %v1930 = vpack.c.b16 %v1918, %v1917
      %v1931 = vpack.c.b16 %v1920, %v1919
      %v1932 = vpack.c.b16 %v1922, %v1921
      %v1933 = vpack.c.b16 %v1924, %v1923
      %v1934 = vpack.c.b16 %v1926, %v1925
      %v1936 = vsel %vm496, %v1927, 0
      %v1939 = vsel %vm496, %v1928, 0
      %v1942 = vsel %vm496, %v1929, 0
      %v1945 = vsel %vm496, %v1930, 0
      %v1948 = vsel %vm496, %v1931, 0
      %v1951 = vsel %vm496, %v1932, 0
      %v1954 = vsel %vm496, %v1933, 0
      %v1957 = vsel %vm496, %v1934, 0
      %v1960 = vsel %vm521, %v1894, 0
      %1962 = vmatprep.subr.bf16.mxu0 0
      %1963 = vmatpush1.bf16.msra.mxu0 0
      %1964 = vmatprep.subr.bf16.mxu0 0
      %1965 = vmatpush1.bf16.msra.mxu0 0
      %1966 = vmatprep.subr.bf16.mxu0 0
      %1967 = vmatpush1.bf16.msra.mxu0 0
      %1968 = vmatprep.subr.bf16.mxu0 0
      %1969 = vmatpush1.bf16.msra.mxu0 0
      %1970 = vmatprep.subr.bf16.mxu0 0
      %1971 = vmatpush1.bf16.msra.mxu0 0
      %1972 = vmatprep.subr.bf16.mxu0 0
      %1973 = vmatpush1.bf16.msra.mxu0 0
      %1974 = vmatprep.subr.bf16.mxu0 0
      %1975 = vmatpush1.bf16.msra.mxu0 0
      %1976 = vmatprep.subr.bf16.mxu0 0
      %1977 = vmatpush1.bf16.msra.mxu0 %v1960
      %1978 = vmatprep.subr.bf16.mxu0 0
      %1979 = vmatpush2.bf16.msra.mxu0 0
      %1980 = vmatprep.subr.bf16.mxu0 0
      %1981 = vmatpush2.bf16.msra.mxu0 0
      %1982 = vmatprep.subr.bf16.mxu0 0
      %1983 = vmatpush2.bf16.msra.mxu0 0
      %1984 = vmatprep.subr.bf16.mxu0 0
      %1985 = vmatpush2.bf16.msra.mxu0 0
      %1986 = vmatprep.subr.bf16.mxu0 0
      %1987 = vmatpush2.bf16.msra.mxu0 0
      %1988 = vmatprep.subr.bf16.mxu0 0
      %1989 = vmatpush2.bf16.msra.mxu0 0
      %1990 = vmatprep.subr.bf16.mxu0 0
      %1991 = vmatpush2.bf16.msra.mxu0 0
      %1992 = vmatprep.subr.bf16.mxu0 0
      %1993 = vmatpush2.bf16.msra.mxu0 0
      %1994 = vmatprep.mubr.bf16.mxu0 0
      %1995 = vmatmul.mubr.bf16.gmra.mxu0 %v1936
      %v1996 = vpop.f32.mrf.mxu0
      %v1997 = vadd.f32 0.0, %v1996
      %v1998 = vpop.f32.mrf.mxu0
      %v1999 = vpop.f32.mrf.mxu0
      %v2000 = vadd.f32 0.0, %v1999
      %v2001 = vpop.f32.mrf.mxu0
      %2002 = vmatprep.mubr.bf16.mxu0 0
      %2003 = vmatmul.mubr.bf16.gmra.mxu0 %v1939
      %v2004 = vpop.f32.mrf.mxu0
      %v2005 = vadd.f32 0.0, %v2004
      %v2006 = vpop.f32.mrf.mxu0
      %v2007 = vpop.f32.mrf.mxu0
      %v2008 = vadd.f32 0.0, %v2007
      %v2009 = vpop.f32.mrf.mxu0
      %2010 = vmatprep.mubr.bf16.mxu0 0
      %2011 = vmatmul.mubr.bf16.gmra.mxu0 %v1942
      %v2012 = vpop.f32.mrf.mxu0
      %v2013 = vadd.f32 0.0, %v2012
      %v2014 = vpop.f32.mrf.mxu0
      %v2015 = vpop.f32.mrf.mxu0
      %v2016 = vadd.f32 0.0, %v2015
      %v2017 = vpop.f32.mrf.mxu0
      %2018 = vmatprep.mubr.bf16.mxu0 0
      %2019 = vmatmul.mubr.bf16.gmra.mxu0 %v1945
      %v2020 = vpop.f32.mrf.mxu0
      %v2021 = vadd.f32 0.0, %v2020
      %v2022 = vpop.f32.mrf.mxu0
      %v2023 = vpop.f32.mrf.mxu0
      %v2024 = vadd.f32 0.0, %v2023
      %v2025 = vpop.f32.mrf.mxu0
      %2026 = vmatprep.mubr.bf16.mxu0 0
      %2027 = vmatmul.mubr.bf16.gmra.mxu0 %v1948
      %v2028 = vpop.f32.mrf.mxu0
      %v2029 = vadd.f32 0.0, %v2028
      %v2030 = vpop.f32.mrf.mxu0
      %v2031 = vpop.f32.mrf.mxu0
      %v2032 = vadd.f32 0.0, %v2031
      %v2033 = vpop.f32.mrf.mxu0
      %2034 = vmatprep.mubr.bf16.mxu0 0
      %2035 = vmatmul.mubr.bf16.gmra.mxu0 %v1951
      %v2036 = vpop.f32.mrf.mxu0
      %v2037 = vadd.f32 0.0, %v2036
      %v2038 = vpop.f32.mrf.mxu0
      %v2039 = vpop.f32.mrf.mxu0
      %v2040 = vadd.f32 0.0, %v2039
      %v2041 = vpop.f32.mrf.mxu0
      %2042 = vmatprep.mubr.bf16.mxu0 0
      %2043 = vmatmul.mubr.bf16.gmra.mxu0 %v1954
      %v2044 = vpop.f32.mrf.mxu0
      %v2045 = vadd.f32 0.0, %v2044
      %v2046 = vpop.f32.mrf.mxu0
      %v2047 = vpop.f32.mrf.mxu0
      %v2048 = vadd.f32 0.0, %v2047
      %v2049 = vpop.f32.mrf.mxu0
      %2050 = vmatprep.mubr.bf16.mxu0 0
      %2051 = vmatmul.mubr.bf16.gmra.mxu0 %v1957
      %v2052 = vpop.f32.mrf.mxu0
      %v2053 = vadd.f32 0.0, %v2052
      %v2054 = vpop.f32.mrf.mxu0
      %v2055 = vpop.f32.mrf.mxu0
      %v2056 = vadd.f32 0.0, %v2055
      %v2057 = vpop.f32.mrf.mxu0
      %2058 = vdwg.mxu0
      %v2059 = vadd.f32 %v1857, %v1997
      %v2060 = vadd.f32 %v1858, %v2000
      %v2061 = vadd.f32 %v1859, %v2005
      %v2062 = vadd.f32 %v1860, %v2008
      %v2063 = vadd.f32 %v1861, %v2013
      %v2064 = vadd.f32 %v1862, %v2016
      %v2065 = vadd.f32 %v1863, %v2021
      %v2066 = vadd.f32 %v1864, %v2024
      %v2067 = vadd.f32 %v1865, %v2029
      %v2068 = vadd.f32 %v1866, %v2032
      %v2069 = vadd.f32 %v1867, %v2037
      %v2070 = vadd.f32 %v1868, %v2040
      %v2071 = vadd.f32 %v1869, %v2045
      %v2072 = vadd.f32 %v1870, %v2048
      %v2073 = vadd.f32 %v1871, %v2053
      %v2074 = vadd.f32 %v1872, %v2056
      %v2075 = vld [vmem:[%s1876] sm:$0xf]
      %v2076 = vld [vmem:[%s1876 + $0x4] sm:$0xf]
      %v2077 = vld [vmem:[%s1876 + $0x8] sm:$0x1]
      %v2078 = vld [vmem:[%s1876 + $0xc] sm:$0xf]
      %v2079 = vld [vmem:[%s1876 + $0x10] sm:$0xf]
      %v2080 = vld [vmem:[%s1876 + $0x14] sm:$0x1]
      %v2081 = vld [vmem:[%s1876 + $0x18] sm:$0xf]
      %v2082 = vld [vmem:[%s1876 + $0x1c] sm:$0xf]
      %v2083 = vld [vmem:[%s1876 + $0x20] sm:$0x1]
      %v2084 = vld [vmem:[%s1876 + $0x24] sm:$0xf]
      %v2085 = vld [vmem:[%s1876 + $0x28] sm:$0xf]
      %v2086 = vld [vmem:[%s1876 + $0x2c] sm:$0x1]
      %v2087 = vld [vmem:[%s1876 + $0x30] sm:$0xf]
      %v2088 = vld [vmem:[%s1876 + $0x34] sm:$0xf]
      %v2089 = vld [vmem:[%s1876 + $0x38] sm:$0x1]
      %v2090 = vld [vmem:[%s1876 + $0x3c] sm:$0xf]
      %v2091 = vld [vmem:[%s1876 + $0x40] sm:$0xf]
      %v2092 = vld [vmem:[%s1876 + $0x44] sm:$0x1]
      %v2093 = vld [vmem:[%s1876 + $0x48] sm:$0xf]
      %v2094 = vld [vmem:[%s1876 + $0x4c] sm:$0xf]
      %v2095 = vld [vmem:[%s1876 + $0x50] sm:$0x1]
      %v2096 = vld [vmem:[%s1876 + $0x54] sm:$0xf]
      %v2097 = vld [vmem:[%s1876 + $0x58] sm:$0xf]
      %v2098 = vld [vmem:[%s1876 + $0x5c] sm:$0x1]
      %v2100 = vshrl.u32 %v2075, 16
      %v2102 = vrot.slane %v2100, 4
      %v2103 = vshll.u32 %v2075, 16
      %v2105 = vrot.slane %v2103, 5
      %v2106 = vor.u32 %v2102, %v2105
      %v2107 = vrot.slane %v2106, 4
      %v2109 = vshll.u32 %v2076, 16
      %v2111 = vrot.slane %v2109, 5
      %v2112 = vsel %vm277, %v2107, %v2111
      %v2113 = vshrl.u32 %v2076, 16
      %v2115 = vrot.slane %v2113, 4
      %v2116 = vor.u32 %v2115, %v2111
      %v2117 = vrot.slane %v2116, 4
      %v2119 = vshll.u32 %v2077, 16
      %v2121 = vrot.slane %v2119, 5
      %v2122 = vsel %vm277, %v2117, %v2121
      %v2124 = vshrl.u32 %v2078, 16
      %v2126 = vrot.slane %v2124, 4
      %v2127 = vshll.u32 %v2078, 16
      %v2129 = vrot.slane %v2127, 5
      %v2130 = vor.u32 %v2126, %v2129
      %v2131 = vrot.slane %v2130, 4
      %v2133 = vshll.u32 %v2079, 16
      %v2135 = vrot.slane %v2133, 5
      %v2136 = vsel %vm277, %v2131, %v2135
      %v2137 = vshrl.u32 %v2079, 16
      %v2139 = vrot.slane %v2137, 4
      %v2140 = vor.u32 %v2139, %v2135
      %v2141 = vrot.slane %v2140, 4
      %v2143 = vshll.u32 %v2080, 16
      %v2145 = vrot.slane %v2143, 5
      %v2146 = vsel %vm277, %v2141, %v2145
      %v2148 = vshrl.u32 %v2081, 16
      %v2150 = vrot.slane %v2148, 4
      %v2151 = vshll.u32 %v2081, 16
      %v2153 = vrot.slane %v2151, 5
      %v2154 = vor.u32 %v2150, %v2153
      %v2155 = vrot.slane %v2154, 4
      %v2157 = vshll.u32 %v2082, 16
      %v2159 = vrot.slane %v2157, 5
      %v2160 = vsel %vm277, %v2155, %v2159
      %v2161 = vshrl.u32 %v2082, 16
      %v2163 = vrot.slane %v2161, 4
      %v2164 = vor.u32 %v2163, %v2159
      %v2165 = vrot.slane %v2164, 4
      %v2167 = vshll.u32 %v2083, 16
      %v2169 = vrot.slane %v2167, 5
      %v2170 = vsel %vm277, %v2165, %v2169
      %v2172 = vshrl.u32 %v2084, 16
      %v2174 = vrot.slane %v2172, 4
      %v2175 = vshll.u32 %v2084, 16
      %v2177 = vrot.slane %v2175, 5
      %v2178 = vor.u32 %v2174, %v2177
      %v2179 = vrot.slane %v2178, 4
      %v2181 = vshll.u32 %v2085, 16
      %v2183 = vrot.slane %v2181, 5
      %v2184 = vsel %vm277, %v2179, %v2183
      %v2185 = vshrl.u32 %v2085, 16
      %v2187 = vrot.slane %v2185, 4
      %v2188 = vor.u32 %v2187, %v2183
      %v2189 = vrot.slane %v2188, 4
      %v2191 = vshll.u32 %v2086, 16
      %v2193 = vrot.slane %v2191, 5
      %v2194 = vsel %vm277, %v2189, %v2193
      %v2196 = vshrl.u32 %v2087, 16
      %v2198 = vrot.slane %v2196, 4
      %v2199 = vshll.u32 %v2087, 16
      %v2201 = vrot.slane %v2199, 5
      %v2202 = vor.u32 %v2198, %v2201
      %v2203 = vrot.slane %v2202, 4
      %v2205 = vshll.u32 %v2088, 16
      %v2207 = vrot.slane %v2205, 5
      %v2208 = vsel %vm277, %v2203, %v2207
      %v2209 = vshrl.u32 %v2088, 16
      %v2211 = vrot.slane %v2209, 4
      %v2212 = vor.u32 %v2211, %v2207
      %v2213 = vrot.slane %v2212, 4
      %v2215 = vshll.u32 %v2089, 16
      %v2217 = vrot.slane %v2215, 5
      %v2218 = vsel %vm277, %v2213, %v2217
      %v2220 = vshrl.u32 %v2090, 16
      %v2222 = vrot.slane %v2220, 4
      %v2223 = vshll.u32 %v2090, 16
      %v2225 = vrot.slane %v2223, 5
      %v2226 = vor.u32 %v2222, %v2225
      %v2227 = vrot.slane %v2226, 4
      %v2229 = vshll.u32 %v2091, 16
      %v2231 = vrot.slane %v2229, 5
      %v2232 = vsel %vm277, %v2227, %v2231
      %v2233 = vshrl.u32 %v2091, 16
      %v2235 = vrot.slane %v2233, 4
      %v2236 = vor.u32 %v2235, %v2231
      %v2237 = vrot.slane %v2236, 4
      %v2239 = vshll.u32 %v2092, 16
      %v2241 = vrot.slane %v2239, 5
      %v2242 = vsel %vm277, %v2237, %v2241
      %v2244 = vshrl.u32 %v2093, 16
      %v2246 = vrot.slane %v2244, 4
      %v2247 = vshll.u32 %v2093, 16
      %v2249 = vrot.slane %v2247, 5
      %v2250 = vor.u32 %v2246, %v2249
      %v2251 = vrot.slane %v2250, 4
      %v2253 = vshll.u32 %v2094, 16
      %v2255 = vrot.slane %v2253, 5
      %v2256 = vsel %vm277, %v2251, %v2255
      %v2257 = vshrl.u32 %v2094, 16
      %v2259 = vrot.slane %v2257, 4
      %v2260 = vor.u32 %v2259, %v2255
      %v2261 = vrot.slane %v2260, 4
      %v2263 = vshll.u32 %v2095, 16
      %v2265 = vrot.slane %v2263, 5
      %v2266 = vsel %vm277, %v2261, %v2265
      %v2268 = vshrl.u32 %v2096, 16
      %v2270 = vrot.slane %v2268, 4
      %v2271 = vshll.u32 %v2096, 16
      %v2273 = vrot.slane %v2271, 5
      %v2274 = vor.u32 %v2270, %v2273
      %v2275 = vrot.slane %v2274, 4
      %v2277 = vshll.u32 %v2097, 16
      %v2279 = vrot.slane %v2277, 5
      %v2280 = vsel %vm277, %v2275, %v2279
      %v2281 = vshrl.u32 %v2097, 16
      %v2283 = vrot.slane %v2281, 4
      %v2284 = vor.u32 %v2283, %v2279
      %v2285 = vrot.slane %v2284, 4
      %v2287 = vshll.u32 %v2098, 16
      %v2289 = vrot.slane %v2287, 5
      %v2290 = vsel %vm277, %v2285, %v2289
      %s2291 = scalar_lea.vmem %s1, 14
      %v2292 = vld [vmem:[%s2291] sm:$0x3]
      %v2293 = vunpack.c.l.b16 %v2112
      %v2294 = vunpack.c.l.b16 %v2122
      %v2295 = vunpack.c.l.b16 %v2136
      %v2296 = vunpack.c.l.b16 %v2146
      %v2297 = vunpack.c.l.b16 %v2160
      %v2298 = vunpack.c.l.b16 %v2170
      %v2299 = vunpack.c.l.b16 %v2184
      %v2300 = vunpack.c.l.b16 %v2194
      %v2301 = vunpack.c.l.b16 %v2208
      %v2302 = vunpack.c.l.b16 %v2218
      %v2303 = vunpack.c.l.b16 %v2232
      %v2304 = vunpack.c.l.b16 %v2242
      %v2305 = vunpack.c.l.b16 %v2256
      %v2306 = vunpack.c.l.b16 %v2266
      %v2307 = vunpack.c.l.b16 %v2280
      %v2308 = vunpack.c.l.b16 %v2290
      %v2309 = vpack.c.b16 %v2294, %v2293
      %v2310 = vpack.c.b16 %v2296, %v2295
      %v2311 = vpack.c.b16 %v2298, %v2297
      %v2312 = vpack.c.b16 %v2300, %v2299
      %v2313 = vpack.c.b16 %v2302, %v2301
      %v2314 = vpack.c.b16 %v2304, %v2303
      %v2315 = vpack.c.b16 %v2306, %v2305
      %v2316 = vpack.c.b16 %v2308, %v2307
      %v2318 = vsel %vm496, %v2309, 0
      %v2321 = vsel %vm496, %v2310, 0
      %v2324 = vsel %vm496, %v2311, 0
      %v2327 = vsel %vm496, %v2312, 0
      %v2330 = vsel %vm496, %v2313, 0
      %v2333 = vsel %vm496, %v2314, 0
      %v2336 = vsel %vm496, %v2315, 0
      %v2339 = vsel %vm496, %v2316, 0
      %v2342 = vsel %vm521, %v2292, 0
      %2344 = vmatprep.subr.bf16.mxu0 0
      %2345 = vmatpush1.bf16.msra.mxu0 0
      %2346 = vmatprep.subr.bf16.mxu0 0
      %2347 = vmatpush1.bf16.msra.mxu0 0
      %2348 = vmatprep.subr.bf16.mxu0 0
      %2349 = vmatpush1.bf16.msra.mxu0 0
      %2350 = vmatprep.subr.bf16.mxu0 0
      %2351 = vmatpush1.bf16.msra.mxu0 0
      %2352 = vmatprep.subr.bf16.mxu0 0
      %2353 = vmatpush1.bf16.msra.mxu0 0
      %2354 = vmatprep.subr.bf16.mxu0 0
      %2355 = vmatpush1.bf16.msra.mxu0 0
      %2356 = vmatprep.subr.bf16.mxu0 0
      %2357 = vmatpush1.bf16.msra.mxu0 0
      %2358 = vmatprep.subr.bf16.mxu0 0
      %2359 = vmatpush1.bf16.msra.mxu0 %v2342
      %2360 = vmatprep.subr.bf16.mxu0 0
      %2361 = vmatpush2.bf16.msra.mxu0 0
      %2362 = vmatprep.subr.bf16.mxu0 0
      %2363 = vmatpush2.bf16.msra.mxu0 0
      %2364 = vmatprep.subr.bf16.mxu0 0
      %2365 = vmatpush2.bf16.msra.mxu0 0
      %2366 = vmatprep.subr.bf16.mxu0 0
      %2367 = vmatpush2.bf16.msra.mxu0 0
      %2368 = vmatprep.subr.bf16.mxu0 0
      %2369 = vmatpush2.bf16.msra.mxu0 0
      %2370 = vmatprep.subr.bf16.mxu0 0
      %2371 = vmatpush2.bf16.msra.mxu0 0
      %2372 = vmatprep.subr.bf16.mxu0 0
      %2373 = vmatpush2.bf16.msra.mxu0 0
      %2374 = vmatprep.subr.bf16.mxu0 0
      %2375 = vmatpush2.bf16.msra.mxu0 0
      %2376 = vmatprep.mubr.bf16.mxu0 0
      %2377 = vmatmul.mubr.bf16.gmra.mxu0 %v2318
      %v2378 = vpop.f32.mrf.mxu0
      %v2379 = vadd.f32 0.0, %v2378
      %v2380 = vpop.f32.mrf.mxu0
      %v2381 = vpop.f32.mrf.mxu0
      %v2382 = vadd.f32 0.0, %v2381
      %v2383 = vpop.f32.mrf.mxu0
      %2384 = vmatprep.mubr.bf16.mxu0 0
      %2385 = vmatmul.mubr.bf16.gmra.mxu0 %v2321
      %v2386 = vpop.f32.mrf.mxu0
      %v2387 = vadd.f32 0.0, %v2386
      %v2388 = vpop.f32.mrf.mxu0
      %v2389 = vpop.f32.mrf.mxu0
      %v2390 = vadd.f32 0.0, %v2389
      %v2391 = vpop.f32.mrf.mxu0
      %2392 = vmatprep.mubr.bf16.mxu0 0
      %2393 = vmatmul.mubr.bf16.gmra.mxu0 %v2324
      %v2394 = vpop.f32.mrf.mxu0
      %v2395 = vadd.f32 0.0, %v2394
      %v2396 = vpop.f32.mrf.mxu0
      %v2397 = vpop.f32.mrf.mxu0
      %v2398 = vadd.f32 0.0, %v2397
      %v2399 = vpop.f32.mrf.mxu0
      %2400 = vmatprep.mubr.bf16.mxu0 0
      %2401 = vmatmul.mubr.bf16.gmra.mxu0 %v2327
      %v2402 = vpop.f32.mrf.mxu0
      %v2403 = vadd.f32 0.0, %v2402
      %v2404 = vpop.f32.mrf.mxu0
      %v2405 = vpop.f32.mrf.mxu0
      %v2406 = vadd.f32 0.0, %v2405
      %v2407 = vpop.f32.mrf.mxu0
      %2408 = vmatprep.mubr.bf16.mxu0 0
      %2409 = vmatmul.mubr.bf16.gmra.mxu0 %v2330
      %v2410 = vpop.f32.mrf.mxu0
      %v2411 = vadd.f32 0.0, %v2410
      %v2412 = vpop.f32.mrf.mxu0
      %v2413 = vpop.f32.mrf.mxu0
      %v2414 = vadd.f32 0.0, %v2413
      %v2415 = vpop.f32.mrf.mxu0
      %2416 = vmatprep.mubr.bf16.mxu0 0
      %2417 = vmatmul.mubr.bf16.gmra.mxu0 %v2333
      %v2418 = vpop.f32.mrf.mxu0
      %v2419 = vadd.f32 0.0, %v2418
      %v2420 = vpop.f32.mrf.mxu0
      %v2421 = vpop.f32.mrf.mxu0
      %v2422 = vadd.f32 0.0, %v2421
      %v2423 = vpop.f32.mrf.mxu0
      %2424 = vmatprep.mubr.bf16.mxu0 0
      %2425 = vmatmul.mubr.bf16.gmra.mxu0 %v2336
      %v2426 = vpop.f32.mrf.mxu0
      %v2427 = vadd.f32 0.0, %v2426
      %v2428 = vpop.f32.mrf.mxu0
      %v2429 = vpop.f32.mrf.mxu0
      %v2430 = vadd.f32 0.0, %v2429
      %v2431 = vpop.f32.mrf.mxu0
      %2432 = vmatprep.mubr.bf16.mxu0 0
      %2433 = vmatmul.mubr.bf16.gmra.mxu0 %v2339
      %v2434 = vpop.f32.mrf.mxu0
      %v2435 = vadd.f32 0.0, %v2434
      %v2436 = vpop.f32.mrf.mxu0
      %v2437 = vpop.f32.mrf.mxu0
      %v2438 = vadd.f32 0.0, %v2437
      %v2439 = vpop.f32.mrf.mxu0
      %2440 = vdwg.mxu0
      %v2441 = vadd.f32 %v2059, %v2379
      %v2442 = vadd.f32 %v2060, %v2382
      %v2443 = vadd.f32 %v2061, %v2387
      %v2444 = vadd.f32 %v2062, %v2390
      %v2445 = vadd.f32 %v2063, %v2395
      %v2446 = vadd.f32 %v2064, %v2398
      %v2447 = vadd.f32 %v2065, %v2403
      %v2448 = vadd.f32 %v2066, %v2406
      %v2449 = vadd.f32 %v2067, %v2411
      %v2450 = vadd.f32 %v2068, %v2414
      %v2451 = vadd.f32 %v2069, %v2419
      %v2452 = vadd.f32 %v2070, %v2422
      %v2453 = vadd.f32 %v2071, %v2427
      %v2454 = vadd.f32 %v2072, %v2430
      %v2455 = vadd.f32 %v2073, %v2435
      %v2456 = vadd.f32 %v2074, %v2438
      %v2457 = vld [vmem:[%s1876] sm:$0xe]
      %v2458 = vld [vmem:[%s1876 + $0xc] sm:$0xe]
      %v2459 = vld [vmem:[%s1876 + $0x18] sm:$0xe]
      %v2460 = vld [vmem:[%s1876 + $0x24] sm:$0xe]
      %v2461 = vld [vmem:[%s1876 + $0x30] sm:$0xe]
      %v2462 = vld [vmem:[%s1876 + $0x3c] sm:$0xe]
      %v2463 = vld [vmem:[%s1876 + $0x48] sm:$0xe]
      %v2464 = vld [vmem:[%s1876 + $0x54] sm:$0xe]
      %v2489 = vrot.slane %v2457, 5
      %v2490 = vrot.slane %v2489, 4
      %v2491 = vrot.slane %v2076, 5
      %v2492 = vsel %vm812, %v2490, %v2491
      %v2493 = vrot.slane %v2491, 4
      %v2494 = vrot.slane %v2077, 5
      %v2495 = vsel %vm812, %v2493, %v2494
      %v2496 = vrot.slane %v2458, 5
      %v2497 = vrot.slane %v2496, 4
      %v2498 = vrot.slane %v2079, 5
      %v2499 = vsel %vm812, %v2497, %v2498
      %v2500 = vrot.slane %v2498, 4
      %v2501 = vrot.slane %v2080, 5
      %v2502 = vsel %vm812, %v2500, %v2501
      %v2503 = vrot.slane %v2459, 5
      %v2504 = vrot.slane %v2503, 4
      %v2505 = vrot.slane %v2082, 5
      %v2506 = vsel %vm812, %v2504, %v2505
      %v2507 = vrot.slane %v2505, 4
      %v2508 = vrot.slane %v2083, 5
      %v2509 = vsel %vm812, %v2507, %v2508
      %v2510 = vrot.slane %v2460, 5
      %v2511 = vrot.slane %v2510, 4
      %v2512 = vrot.slane %v2085, 5
      %v2513 = vsel %vm812, %v2511, %v2512
      %v2514 = vrot.slane %v2512, 4
      %v2515 = vrot.slane %v2086, 5
      %v2516 = vsel %vm812, %v2514, %v2515
      %v2517 = vrot.slane %v2461, 5
      %v2518 = vrot.slane %v2517, 4
      %v2519 = vrot.slane %v2088, 5
      %v2520 = vsel %vm812, %v2518, %v2519
      %v2521 = vrot.slane %v2519, 4
      %v2522 = vrot.slane %v2089, 5
      %v2523 = vsel %vm812, %v2521, %v2522
      %v2524 = vrot.slane %v2462, 5
      %v2525 = vrot.slane %v2524, 4
      %v2526 = vrot.slane %v2091, 5
      %v2527 = vsel %vm812, %v2525, %v2526
      %v2528 = vrot.slane %v2526, 4
      %v2529 = vrot.slane %v2092, 5
      %v2530 = vsel %vm812, %v2528, %v2529
      %v2531 = vrot.slane %v2463, 5
      %v2532 = vrot.slane %v2531, 4
      %v2533 = vrot.slane %v2094, 5
      %v2534 = vsel %vm812, %v2532, %v2533
      %v2535 = vrot.slane %v2533, 4
      %v2536 = vrot.slane %v2095, 5
      %v2537 = vsel %vm812, %v2535, %v2536
      %v2538 = vrot.slane %v2464, 5
      %v2539 = vrot.slane %v2538, 4
      %v2540 = vrot.slane %v2097, 5
      %v2541 = vsel %vm812, %v2539, %v2540
      %v2542 = vrot.slane %v2540, 4
      %v2543 = vrot.slane %v2098, 5
      %v2544 = vsel %vm812, %v2542, %v2543
      %s2545 = scalar_lea.vmem %s1, 16
      %v2546 = vld [vmem:[%s2545] sm:$0x3]
      %v2547 = vunpack.c.l.b16 %v2492
      %v2548 = vunpack.c.l.b16 %v2495
      %v2549 = vunpack.c.l.b16 %v2499
      %v2550 = vunpack.c.l.b16 %v2502
      %v2551 = vunpack.c.l.b16 %v2506
      %v2552 = vunpack.c.l.b16 %v2509
      %v2553 = vunpack.c.l.b16 %v2513
      %v2554 = vunpack.c.l.b16 %v2516
      %v2555 = vunpack.c.l.b16 %v2520
      %v2556 = vunpack.c.l.b16 %v2523
      %v2557 = vunpack.c.l.b16 %v2527
      %v2558 = vunpack.c.l.b16 %v2530
      %v2559 = vunpack.c.l.b16 %v2534
      %v2560 = vunpack.c.l.b16 %v2537
      %v2561 = vunpack.c.l.b16 %v2541
      %v2562 = vunpack.c.l.b16 %v2544
      %v2563 = vpack.c.b16 %v2548, %v2547
      %v2564 = vpack.c.b16 %v2550, %v2549
      %v2565 = vpack.c.b16 %v2552, %v2551
      %v2566 = vpack.c.b16 %v2554, %v2553
      %v2567 = vpack.c.b16 %v2556, %v2555
      %v2568 = vpack.c.b16 %v2558, %v2557
      %v2569 = vpack.c.b16 %v2560, %v2559
      %v2570 = vpack.c.b16 %v2562, %v2561
      %v2572 = vsel %vm496, %v2563, 0
      %v2575 = vsel %vm496, %v2564, 0
      %v2578 = vsel %vm496, %v2565, 0
      %v2581 = vsel %vm496, %v2566, 0
      %v2584 = vsel %vm496, %v2567, 0
      %v2587 = vsel %vm496, %v2568, 0
      %v2590 = vsel %vm496, %v2569, 0
      %v2593 = vsel %vm496, %v2570, 0
      %v2596 = vsel %vm521, %v2546, 0
      %2598 = vmatprep.subr.bf16.mxu0 0
      %2599 = vmatpush1.bf16.msra.mxu0 0
      %2600 = vmatprep.subr.bf16.mxu0 0
      %2601 = vmatpush1.bf16.msra.mxu0 0
      %2602 = vmatprep.subr.bf16.mxu0 0
      %2603 = vmatpush1.bf16.msra.mxu0 0
      %2604 = vmatprep.subr.bf16.mxu0 0
      %2605 = vmatpush1.bf16.msra.mxu0 0
      %2606 = vmatprep.subr.bf16.mxu0 0
      %2607 = vmatpush1.bf16.msra.mxu0 0
      %2608 = vmatprep.subr.bf16.mxu0 0
      %2609 = vmatpush1.bf16.msra.mxu0 0
      %2610 = vmatprep.subr.bf16.mxu0 0
      %2611 = vmatpush1.bf16.msra.mxu0 0
      %2612 = vmatprep.subr.bf16.mxu0 0
      %2613 = vmatpush1.bf16.msra.mxu0 %v2596
      %2614 = vmatprep.subr.bf16.mxu0 0
      %2615 = vmatpush2.bf16.msra.mxu0 0
      %2616 = vmatprep.subr.bf16.mxu0 0
      %2617 = vmatpush2.bf16.msra.mxu0 0
      %2618 = vmatprep.subr.bf16.mxu0 0
      %2619 = vmatpush2.bf16.msra.mxu0 0
      %2620 = vmatprep.subr.bf16.mxu0 0
      %2621 = vmatpush2.bf16.msra.mxu0 0
      %2622 = vmatprep.subr.bf16.mxu0 0
      %2623 = vmatpush2.bf16.msra.mxu0 0
      %2624 = vmatprep.subr.bf16.mxu0 0
      %2625 = vmatpush2.bf16.msra.mxu0 0
      %2626 = vmatprep.subr.bf16.mxu0 0
      %2627 = vmatpush2.bf16.msra.mxu0 0
      %2628 = vmatprep.subr.bf16.mxu0 0
      %2629 = vmatpush2.bf16.msra.mxu0 0
      %2630 = vmatprep.mubr.bf16.mxu0 0
      %2631 = vmatmul.mubr.bf16.gmra.mxu0 %v2572
      %v2632 = vpop.f32.mrf.mxu0
      %v2633 = vadd.f32 0.0, %v2632
      %v2634 = vpop.f32.mrf.mxu0
      %v2635 = vpop.f32.mrf.mxu0
      %v2636 = vadd.f32 0.0, %v2635
      %v2637 = vpop.f32.mrf.mxu0
      %2638 = vmatprep.mubr.bf16.mxu0 0
      %2639 = vmatmul.mubr.bf16.gmra.mxu0 %v2575
      %v2640 = vpop.f32.mrf.mxu0
      %v2641 = vadd.f32 0.0, %v2640
      %v2642 = vpop.f32.mrf.mxu0
      %v2643 = vpop.f32.mrf.mxu0
      %v2644 = vadd.f32 0.0, %v2643
      %v2645 = vpop.f32.mrf.mxu0
      %2646 = vmatprep.mubr.bf16.mxu0 0
      %2647 = vmatmul.mubr.bf16.gmra.mxu0 %v2578
      %v2648 = vpop.f32.mrf.mxu0
      %v2649 = vadd.f32 0.0, %v2648
      %v2650 = vpop.f32.mrf.mxu0
      %v2651 = vpop.f32.mrf.mxu0
      %v2652 = vadd.f32 0.0, %v2651
      %v2653 = vpop.f32.mrf.mxu0
      %2654 = vmatprep.mubr.bf16.mxu0 0
      %2655 = vmatmul.mubr.bf16.gmra.mxu0 %v2581
      %v2656 = vpop.f32.mrf.mxu0
      %v2657 = vadd.f32 0.0, %v2656
      %v2658 = vpop.f32.mrf.mxu0
      %v2659 = vpop.f32.mrf.mxu0
      %v2660 = vadd.f32 0.0, %v2659
      %v2661 = vpop.f32.mrf.mxu0
      %2662 = vmatprep.mubr.bf16.mxu0 0
      %2663 = vmatmul.mubr.bf16.gmra.mxu0 %v2584
      %v2664 = vpop.f32.mrf.mxu0
      %v2665 = vadd.f32 0.0, %v2664
      %v2666 = vpop.f32.mrf.mxu0
      %v2667 = vpop.f32.mrf.mxu0
      %v2668 = vadd.f32 0.0, %v2667
      %v2669 = vpop.f32.mrf.mxu0
      %2670 = vmatprep.mubr.bf16.mxu0 0
      %2671 = vmatmul.mubr.bf16.gmra.mxu0 %v2587
      %v2672 = vpop.f32.mrf.mxu0
      %v2673 = vadd.f32 0.0, %v2672
      %v2674 = vpop.f32.mrf.mxu0
      %v2675 = vpop.f32.mrf.mxu0
      %v2676 = vadd.f32 0.0, %v2675
      %v2677 = vpop.f32.mrf.mxu0
      %2678 = vmatprep.mubr.bf16.mxu0 0
      %2679 = vmatmul.mubr.bf16.gmra.mxu0 %v2590
      %v2680 = vpop.f32.mrf.mxu0
      %v2681 = vadd.f32 0.0, %v2680
      %v2682 = vpop.f32.mrf.mxu0
      %v2683 = vpop.f32.mrf.mxu0
      %v2684 = vadd.f32 0.0, %v2683
      %v2685 = vpop.f32.mrf.mxu0
      %2686 = vmatprep.mubr.bf16.mxu0 0
      %2687 = vmatmul.mubr.bf16.gmra.mxu0 %v2593
      %v2688 = vpop.f32.mrf.mxu0
      %v2689 = vadd.f32 0.0, %v2688
      %v2690 = vpop.f32.mrf.mxu0
      %v2691 = vpop.f32.mrf.mxu0
      %v2692 = vadd.f32 0.0, %v2691
      %v2693 = vpop.f32.mrf.mxu0
      %2694 = vdwg.mxu0
      %v2695 = vadd.f32 %v2441, %v2633
      %v2696 = vadd.f32 %v2442, %v2636
      %v2697 = vadd.f32 %v2443, %v2641
      %v2698 = vadd.f32 %v2444, %v2644
      %v2699 = vadd.f32 %v2445, %v2649
      %v2700 = vadd.f32 %v2446, %v2652
      %v2701 = vadd.f32 %v2447, %v2657
      %v2702 = vadd.f32 %v2448, %v2660
      %v2703 = vadd.f32 %v2449, %v2665
      %v2704 = vadd.f32 %v2450, %v2668
      %v2705 = vadd.f32 %v2451, %v2673
      %v2706 = vadd.f32 %v2452, %v2676
      %v2707 = vadd.f32 %v2453, %v2681
      %v2708 = vadd.f32 %v2454, %v2684
      %v2709 = vadd.f32 %v2455, %v2689
      %v2710 = vadd.f32 %v2456, %v2692
      %v2711 = vld [vmem:[%s2] sm:$0x1]
      %v2713 = vlaneseq
      %v2714 = vshrl.u32 %v2713, 7
      %v2715 = vsub.s32 0, %v2714
      %v2716 = vrot.slane %v2711, %v2715
      %v2718 = vadd.f32 %v2695, %v2716
      %v2719 = vadd.f32 %v2696, %v2716
      %v2720 = vadd.f32 %v2697, %v2716
      %v2721 = vadd.f32 %v2698, %v2716
      %v2722 = vadd.f32 %v2699, %v2716
      %v2723 = vadd.f32 %v2700, %v2716
      %v2724 = vadd.f32 %v2701, %v2716
      %v2725 = vadd.f32 %v2702, %v2716
      %v2726 = vadd.f32 %v2703, %v2716
      %v2727 = vadd.f32 %v2704, %v2716
      %v2728 = vadd.f32 %v2705, %v2716
      %v2729 = vadd.f32 %v2706, %v2716
      %v2730 = vadd.f32 %v2707, %v2716
      %v2731 = vadd.f32 %v2708, %v2716
      %v2732 = vadd.f32 %v2709, %v2716
      %v2733 = vadd.f32 %v2710, %v2716
      %v2734 = vmax.f32 %v2718, 0.0
      %v2735 = vmax.f32 %v2719, 0.0
      %v2736 = vmax.f32 %v2720, 0.0
      %v2737 = vmax.f32 %v2721, 0.0
      %v2738 = vmax.f32 %v2722, 0.0
      %v2739 = vmax.f32 %v2723, 0.0
      %v2740 = vmax.f32 %v2724, 0.0
      %v2741 = vmax.f32 %v2725, 0.0
      %v2742 = vmax.f32 %v2726, 0.0
      %v2743 = vmax.f32 %v2727, 0.0
      %v2744 = vmax.f32 %v2728, 0.0
      %v2745 = vmax.f32 %v2729, 0.0
      %v2746 = vmax.f32 %v2730, 0.0
      %v2747 = vmax.f32 %v2731, 0.0
      %v2748 = vmax.f32 %v2732, 0.0
      %v2749 = vmax.f32 %v2733, 0.0
      %2750 = vxpose.xlu0.b32.start [1/16] %v2734, 128
      %2751 = vxpose.xlu0.b32.cont [2/16] %v2735, 128
      %2752 = vxpose.xlu0.b32.cont [3/16] %v2736, 128
      %2753 = vxpose.xlu0.b32.cont [4/16] %v2737, 128
      %2754 = vxpose.xlu0.b32.cont [5/16] %v2738, 128
      %2755 = vxpose.xlu0.b32.cont [6/16] %v2739, 128
      %2756 = vxpose.xlu0.b32.cont [7/16] %v2740, 128
      %2757 = vxpose.xlu0.b32.cont [8/16] %v2741, 128
      %2758 = vxpose.xlu0.b32.cont [9/16] %v2742, 128
      %2759 = vxpose.xlu0.b32.cont [10/16] %v2743, 128
      %2760 = vxpose.xlu0.b32.cont [11/16] %v2744, 128
      %2761 = vxpose.xlu0.b32.cont [12/16] %v2745, 128
      %2762 = vxpose.xlu0.b32.cont [13/16] %v2746, 128
      %2763 = vxpose.xlu0.b32.cont [14/16] %v2747, 128
      %2764 = vxpose.xlu0.b32.cont [15/16] %v2748, 128
      %2765 = vxpose.xlu0.b32.end [16/16] %v2749, 128
      %v2766 = vpop.trf.xlu0
      %v2767 = vpop.trf.xlu0
      %v2768 = vpop.trf.xlu0
      %v2769 = vpop.trf.xlu0
      %v2770 = vpop.trf.xlu0
      %v2771 = vpop.trf.xlu0
      %v2772 = vpop.trf.xlu0
      %v2773 = vpop.trf.xlu0
      %v2774 = vpop.trf.xlu0
      %v2775 = vpop.trf.xlu0
      %v2776 = vpop.trf.xlu0
      %v2777 = vpop.trf.xlu0
      %v2778 = vpop.trf.xlu0
      %v2779 = vpop.trf.xlu0
      %v2780 = vpop.trf.xlu0
      %v2781 = vpop.trf.xlu0
      %v2782 = vpack.c.bf16 %v2766, %v2766
      %v2783 = vld [vmem:[%s3] sm:$0xf]
      %v2784 = vld [vmem:[%s4] sm:$0xff]
      %2786 = vset.pattern.permute.xlu0 0
      %2787 = vperm.xlu0 %2786, %v2784
      %v2788 = vpop.permute.xlu0 %2787
      %v2791 = vsel %vm496, %v2783, 0
      %v2794 = vsel %vm521, %v2782, 0
      %2796 = vmatprep.subr.bf16.mxu0 0
      %2797 = vmatpush1.bf16.msra.mxu0 0
      %2798 = vmatprep.subr.bf16.mxu0 0
      %2799 = vmatpush1.bf16.msra.mxu0 0
      %2800 = vmatprep.subr.bf16.mxu0 0
      %2801 = vmatpush1.bf16.msra.mxu0 0
      %2802 = vmatprep.subr.bf16.mxu0 0
      %2803 = vmatpush1.bf16.msra.mxu0 0
      %2804 = vmatprep.subr.bf16.mxu0 0
      %2805 = vmatpush1.bf16.msra.mxu0 0
      %2806 = vmatprep.subr.bf16.mxu0 0
      %2807 = vmatpush1.bf16.msra.mxu0 0
      %2808 = vmatprep.subr.bf16.mxu0 0
      %2809 = vmatpush1.bf16.msra.mxu0 0
      %2810 = vmatprep.subr.bf16.mxu0 0
      %2811 = vmatpush1.bf16.msra.mxu0 %v2794
      %2812 = vmatprep.subr.bf16.mxu0 0
      %2813 = vmatpush2.bf16.msra.mxu0 0
      %2814 = vmatprep.subr.bf16.mxu0 0
      %2815 = vmatpush2.bf16.msra.mxu0 0
      %2816 = vmatprep.subr.bf16.mxu0 0
      %2817 = vmatpush2.bf16.msra.mxu0 0
      %2818 = vmatprep.subr.bf16.mxu0 0
      %2819 = vmatpush2.bf16.msra.mxu0 0
      %2820 = vmatprep.subr.bf16.mxu0 0
      %2821 = vmatpush2.bf16.msra.mxu0 0
      %2822 = vmatprep.subr.bf16.mxu0 0
      %2823 = vmatpush2.bf16.msra.mxu0 0
      %2824 = vmatprep.subr.bf16.mxu0 0
      %2825 = vmatpush2.bf16.msra.mxu0 0
      %2826 = vmatprep.subr.bf16.mxu0 0
      %2827 = vmatpush2.bf16.msra.mxu0 0
      %2828 = vmatprep.mubr.bf16.mxu0 0
      %2829 = vmatmul.mubr.bf16.gmra.mxu0 %v2791
      %v2830 = vpop.f32.mrf.mxu0
      %v2831 = vadd.f32 %v2788, %v2830
      %v2832 = vpop.f32.mrf.mxu0
      %v2833 = vpop.f32.mrf.mxu0
      %v2834 = vpop.f32.mrf.mxu0
      %2835 = vdwg.mxu0
      %v2836 = vmax.f32 %v2831, 0.0
      %v2837 = vpack.c.bf16 %v2836, %v2836
      %2838 = vst [vmem:[%s244] sm:$0xf] %v2837
      %p2839 = scmp.lt.s32.totalorder %s20, 1
      %s2840 = scalar_select %p2839, %s20, 1
      %p2841 = scmp.lt.s32.totalorder %s21, 1
      %s2842 = scalar_select %p2841, %s21, 1
      %s2843 = smul.addr %s2840, 2
      %s2844 = sadd.s32 %s2842, %s2843
      %s2845 = smul.addr %s2844, 4
      %s2846 = scalar_lea.vmem %s5, %s2845
      // Predicated region
      $region41: #{depthwise_separable_conv.1} parent=39 // pred_check
        %p2847 = pneg %p158
      $region42: #{depthwise_separable_conv.1} parent=39 // pred_check_branch
        %2849 = sbr.rel (%p2847) target = $region44
      $region43: #{depthwise_separable_conv.1} parent=39 // pred_region
        _
      $region44: #{depthwise_separable_conv.1} parent=39 // pred_fallthru
        _
    $region40: #{depthwise_separable_conv.1} parent=5 // pred_fallthru
      _
    %p2850 = scmp.le.s32.totalorder 2, %s11
    // Predicated region
    $region45: #{depthwise_separable_conv.1} parent=5 // pred_check
      %p2851 = pneg %p2850
    $region46: #{depthwise_separable_conv.1} parent=5 // pred_check_branch
      %2853 = sbr.rel (%p2851) target = $region48
    $region47: #{depthwise_separable_conv.1} parent=5 // pred_region
      %s2854 = ssub.s32 %s11, 2
      // Predicated region
      $region49: #{depthwise_separable_conv.1} parent=47 // pred_check
        %p2855 = pneg %p164
      $region50: #{depthwise_separable_conv.1} parent=47 // pred_check_branch
        %2857 = sbr.rel (%p2855) target = $region52
      $region51: #{depthwise_separable_conv.1} parent=47 // pred_region
        %p2858 = scmp.lt.s32.totalorder %s22, 1
        %s2859 = scalar_select %p2858, %s22, 1
        %p2860 = scmp.lt.s32.totalorder %s23, 1
        %s2861 = scalar_select %p2860, %s23, 1
        %s2862 = smul.addr %s2859, 2
        %s2863 = sadd.s32 %s2861, %s2862
        %s2864 = smul.addr %s2863, 4
        %s2865 = scalar_lea.vmem %s5, %s2864
      $region52: #{depthwise_separable_conv.1} parent=47 // pred_fallthru
        _
    $region48: #{depthwise_separable_conv.1} parent=5 // pred_fallthru
      _
  $region6: #{depthwise_separable_conv.1} parent=0 // loop_footer
    %s15 = sadd.s32 1, %s11
  $region7: #{depthwise_separable_conv.1} parent=0 // loop_footer_branch
    %10 = sbr.rel target = $region3
  $region8: #{depthwise_separable_conv.1} parent=0 // loop_exit
    _

</llo_original>
